<compile_context>
chip_gen: v7x
topology: tpu7x:2x2x1
jax: 0.10.0
libtpu: 0.0.40
codegen_flags: <defaults>
</compile_context>

<pallas_src>
import functools

import jax
import jax.numpy as jnp
from jax.experimental import pallas as pl


def _sigmoid(x):
    # Single EUP tanh + one VPU fma; avoids the multi-op f32 reciprocal path.
    return 0.5 * (jnp.tanh(0.5 * x) + 1.0)


def lstm_fused_kernel(x_ref, w_ih_ref, b_g_ref, w_hh_ref, h0_ref, c0_ref,
                      w_out_ref, b_out_ref,
                      logp_ref, h_out_ref, c_out_ref, *, T, B, H):
    """Whole forward in one kernel invocation.

    x_ref    : (T*B, I)   all timesteps, batch-padded
    w_ih_ref : (I, 4H)    pre-transposed
    b_g_ref  : (1, 4H)    b_ih + b_hh fused
    w_hh_ref : (H, 4H)    pre-transposed
    h0/c0    : (B, H)
    w_out_ref: (H, O_pad) pre-transposed, zero-padded to 128 lanes
    b_out_ref: (1, O_pad) padded lanes hold -1e30 so they vanish in softmax
    outputs  : logp (B, O_pad), h_n (B, H), c_n (B, H)
    """
    # ---- input projection for every timestep: one MXU matmul -------------
    x_proj = (
        jnp.dot(x_ref[...], w_ih_ref[...], preferred_element_type=jnp.float32)
        + b_g_ref[...]
    )                                                   # (T*B, 4H)

    w_hh = w_hh_ref[...]
    h = h0_ref[...]                                     # carried in vregs
    c = c0_ref[...]

    # ---- fully unrolled time recurrence (T static, tiny state) -----------
    for t in range(T):
        gates = x_proj[t * B:(t + 1) * B, :] + jnp.dot(
            h, w_hh, preferred_element_type=jnp.float32)        # (B, 4H)

        # Whole-vreg nonlinearities, slice the results afterwards.
        sg = _sigmoid(gates)
        tg = jnp.tanh(gates)
        i = sg[:, 0:H]              # PyTorch gate order: i, f, g, o
        f = sg[:, H:2 * H]
        g = tg[:, 2 * H:3 * H]
        o = sg[:, 3 * H:4 * H]

        c = f * c + i * g
        h = o * jnp.tanh(c)

    h_out_ref[...] = h
    c_out_ref[...] = c

    # ---- fused hidden2out + log_softmax epilogue (lane-dense, padded) ----
    logits = (
        jnp.dot(h, w_out_ref[...], preferred_element_type=jnp.float32)
        + b_out_ref[...]
    )                                                   # (B, O_pad)
    m = jnp.max(logits, axis=1, keepdims=True)
    shifted = logits - m
    lse = jnp.log(jnp.sum(jnp.exp(shifted), axis=1, keepdims=True))
    logp_ref[...] = shifted - lse


def lstm_forward(x, h0, c0, w_ih, w_hh, b_ih, b_hh, w_out, b_out):
    """Full module forward.

    x      : (T, B, I)  float32
    h0, c0 : (1, B, H)  float32   (num_layers = 1, PyTorch layout)
    w_ih   : (4H, I), w_hh: (4H, H), b_ih/b_hh: (4H,)   -- nn.LSTM layout
    w_out  : (O, H),  b_out: (O,)                        -- nn.Linear layout
    returns (log_probs (B, O), (h_n (1,B,H), c_n (1,B,H)))
    """
    T, B, I = x.shape
    H = w_hh.shape[1]
    O = w_out.shape[0]

    # Pad batch to full sublanes (8) and output classes to full lanes (128).
    B_pad = max(8, pl.cdiv(B, 8) * 8)
    O_pad = max(128, pl.cdiv(O, 128) * 128)

    x_p = jnp.zeros((T, B_pad, I), jnp.float32).at[:, :B, :].set(x)
    h0_p = jnp.zeros((B_pad, H), jnp.float32).at[:B, :].set(h0.reshape(B, H))
    c0_p = jnp.zeros((B_pad, H), jnp.float32).at[:B, :].set(c0.reshape(B, H))

    # Pre-transpose weights once; fuse the two LSTM biases.
    w_ih_t = w_ih.T                                  # (I, 4H)
    w_hh_t = w_hh.T                                  # (H, 4H)
    b_gates = (b_ih + b_hh).reshape(1, 4 * H)        # (1, 4H)

    w_out_t = jnp.zeros((H, O_pad), jnp.float32).at[:, :O].set(w_out.T)
    # Padded lanes get a very negative bias so they contribute 0 to softmax.
    b_out_p = jnp.full((1, O_pad), -1e30, jnp.float32).at[0, :O].set(b_out)

    x_flat = x_p.reshape(T * B_pad, I)

    kernel = functools.partial(lstm_fused_kernel, T=T, B=B_pad, H=H)

    logp_p, h_n_p, c_n_p = pl.pallas_call(
        kernel,
        out_shape=(
            jax.ShapeDtypeStruct((B_pad, O_pad), jnp.float32),
            jax.ShapeDtypeStruct((B_pad, H), jnp.float32),
            jax.ShapeDtypeStruct((B_pad, H), jnp.float32),
        ),
        in_specs=[
            pl.BlockSpec((T * B_pad, I), lambda: (0, 0)),
            pl.BlockSpec((I, 4 * H), lambda: (0, 0)),
            pl.BlockSpec((1, 4 * H), lambda: (0, 0)),
            pl.BlockSpec((H, 4 * H), lambda: (0, 0)),
            pl.BlockSpec((B_pad, H), lambda: (0, 0)),
            pl.BlockSpec((B_pad, H), lambda: (0, 0)),
            pl.BlockSpec((H, O_pad), lambda: (0, 0)),
            pl.BlockSpec((1, O_pad), lambda: (0, 0)),
        ],
        out_specs=(
            pl.BlockSpec((B_pad, O_pad), lambda: (0, 0)),
            pl.BlockSpec((B_pad, H), lambda: (0, 0)),
            pl.BlockSpec((B_pad, H), lambda: (0, 0)),
        ),
    )(x_flat, w_ih_t, b_gates, w_hh_t, h0_p, c0_p, w_out_t, b_out_p)

    # Slice the padding away.
    log_probs = logp_p[:B, :O]
    h_n = h_n_p[:B, :].reshape(1, B, H)
    c_n = c_n_p[:B, :].reshape(1, B, H)
    # TODO(synk): for production batches (B >= 16) on v7x, add a "parallel"
    # batch-tile grid axis so both TensorCores run half the batch each.
    return log_probs, (h_n, c_n)


def _reference(x, h0, c0, w_ih, w_hh, b_ih, b_hh, w_out, b_out):
    """Pure-JAX reference of the same PyTorch forward."""
    T, B, _ = x.shape
    H = w_hh.shape[1]
    h = h0.reshape(B, H)
    c = c0.reshape(B, H)
    for t in range(T):
        gates = x[t] @ w_ih.T + b_ih + h @ w_hh.T + b_hh
        i = jax.nn.sigmoid(gates[:, 0:H])
        f = jax.nn.sigmoid(gates[:, H:2 * H])
        g = jnp.tanh(gates[:, 2 * H:3 * H])
        o = jax.nn.sigmoid(gates[:, 3 * H:4 * H])
        c = f * c + i * g
        h = o * jnp.tanh(c)
    logits = h @ w_out.T + b_out
    logp = logits - jax.scipy.special.logsumexp(logits, axis=1, keepdims=True)
    return logp, h, c


if __name__ == "__main__":
    # Small shapes consistent with the module's forward.
    T = 8            # sequence length (name length)
    B = 2            # batch
    I = 64           # input_size (one-hot char vocab)
    H = 32           # hidden_size  (4H = 128 -> lane-dense gate matmul)
    O = 16           # output_size  (num classes)

    key = jax.random.PRNGKey(0)
    kx, kwih, kwhh, kbih, kbhh, kwo, kbo = jax.random.split(key, 7)

    # PyTorch-style uniform init bound 1/sqrt(H).
    bound = 1.0 / (H ** 0.5)
    w_ih = jax.random.uniform(kwih, (4 * H, I), jnp.float32, -bound, bound)
    w_hh = jax.random.uniform(kwhh, (4 * H, H), jnp.float32, -bound, bound)
    b_ih = jax.random.uniform(kbih, (4 * H,), jnp.float32, -bound, bound)
    b_hh = jax.random.uniform(kbhh, (4 * H,), jnp.float32, -bound, bound)
    w_out = jax.random.uniform(kwo, (O, H), jnp.float32, -bound, bound)
    b_out = jax.random.uniform(kbo, (O,), jnp.float32, -bound, bound)

    x = jax.random.normal(kx, (T, B, I), jnp.float32)
    h0 = jnp.zeros((1, B, H), jnp.float32)   # initHidden() analogue
    c0 = jnp.zeros((1, B, H), jnp.float32)

    logp, (h_n, c_n) = lstm_forward(x, h0, c0, w_ih, w_hh, b_ih, b_hh,
                                    w_out, b_out)
    jax.block_until_ready(logp)
    jax.block_until_ready(h_n)
    jax.block_until_ready(c_n)

    ref_logp, ref_h, ref_c = _reference(x, h0, c0, w_ih, w_hh, b_ih, b_hh,
                                        w_out, b_out)
    assert jnp.allclose(logp, ref_logp, atol=1e-4), "log_softmax output mismatch"
    assert jnp.allclose(h_n.reshape(B, H), ref_h, atol=1e-4), "h_n mismatch"
    assert jnp.allclose(c_n.reshape(B, H), ref_c, atol=1e-4), "c_n mismatch"

    print("KERNEL_OK")
</pallas_src>

<mosaic_0001>
module attributes {stable_mosaic.version = 11 : i64} {
  func.func @lstm_fused_kernel(%arg0: memref<64x64xf32, #tpu.memory_space<vmem>>, %arg1: memref<64x128xf32, #tpu.memory_space<vmem>>, %arg2: memref<1x128xf32, #tpu.memory_space<vmem>>, %arg3: memref<32x128xf32, #tpu.memory_space<vmem>>, %arg4: memref<8x32xf32, #tpu.memory_space<vmem>>, %arg5: memref<8x32xf32, #tpu.memory_space<vmem>>, %arg6: memref<32x128xf32, #tpu.memory_space<vmem>>, %arg7: memref<1x128xf32, #tpu.memory_space<vmem>>, %arg8: memref<8x128xf32, #tpu.memory_space<vmem>>, %arg9: memref<8x32xf32, #tpu.memory_space<vmem>>, %arg10: memref<8x32xf32, #tpu.memory_space<vmem>>) attributes {dimension_semantics = [], scalar_prefetch = 0 : i64, scratch_operands = 0 : i64, tpu.core_type = #tpu.core_type<tc>} {
    %c0 = arith.constant 0 : index
    %c0_0 = arith.constant 0 : index
    %0 = vector.load %arg0[%c0, %c0_0] : memref<64x64xf32, #tpu.memory_space<vmem>>, vector<64x64xf32>
    %c0_1 = arith.constant 0 : index
    %c0_2 = arith.constant 0 : index
    %1 = vector.load %arg1[%c0_1, %c0_2] : memref<64x128xf32, #tpu.memory_space<vmem>>, vector<64x128xf32>
    %cst = arith.constant dense<0.000000e+00> : vector<64x128xf32>
    %2 = tpu.matmul %0, %1, %cst {dimension_numbers = #tpu.dot_dimension_numbers<[1], [0], [0], [1], [0, 0, 1, 1], [], []>} : vector<64x64xf32>, vector<64x128xf32>, vector<64x128xf32> -> vector<64x128xf32>
    %c0_3 = arith.constant 0 : index
    %c0_4 = arith.constant 0 : index
    %3 = vector.load %arg2[%c0_3, %c0_4] : memref<1x128xf32, #tpu.memory_space<vmem>>, vector<1x128xf32>
    %4 = vector.broadcast %3 : vector<1x128xf32> to vector<64x128xf32>
    %5 = arith.addf %2, %4 : vector<64x128xf32>
    %c0_5 = arith.constant 0 : index
    %c0_6 = arith.constant 0 : index
    %6 = vector.load %arg3[%c0_5, %c0_6] : memref<32x128xf32, #tpu.memory_space<vmem>>, vector<32x128xf32>
    %c0_7 = arith.constant 0 : index
    %c0_8 = arith.constant 0 : index
    %7 = vector.load %arg4[%c0_7, %c0_8] : memref<8x32xf32, #tpu.memory_space<vmem>>, vector<8x32xf32>
    %c0_9 = arith.constant 0 : index
    %c0_10 = arith.constant 0 : index
    %8 = vector.load %arg5[%c0_9, %c0_10] : memref<8x32xf32, #tpu.memory_space<vmem>>, vector<8x32xf32>
    %9 = vector.extract_strided_slice %5 {offsets = [0, 0], sizes = [8, 128], strides = [1, 1]} : vector<64x128xf32> to vector<8x128xf32>
    %cst_11 = arith.constant dense<0.000000e+00> : vector<8x128xf32>
    %10 = tpu.matmul %7, %6, %cst_11 {dimension_numbers = #tpu.dot_dimension_numbers<[1], [0], [0], [1], [0, 0, 1, 1], [], []>} : vector<8x32xf32>, vector<32x128xf32>, vector<8x128xf32> -> vector<8x128xf32>
    %11 = arith.addf %9, %10 : vector<8x128xf32>
    %cst_12 = arith.constant 5.000000e-01 : f32
    %12 = vector.broadcast %cst_12 : f32 to vector<8x128xf32>
    %13 = arith.mulf %12, %11 : vector<8x128xf32>
    %14 = math.tanh %13 : vector<8x128xf32>
    %cst_13 = arith.constant 1.000000e+00 : f32
    %15 = vector.broadcast %cst_13 : f32 to vector<8x128xf32>
    %16 = arith.addf %14, %15 : vector<8x128xf32>
    %cst_14 = arith.constant 5.000000e-01 : f32
    %17 = vector.broadcast %cst_14 : f32 to vector<8x128xf32>
    %18 = arith.mulf %17, %16 : vector<8x128xf32>
    %19 = math.tanh %11 : vector<8x128xf32>
    %20 = vector.extract_strided_slice %18 {offsets = [0, 0], sizes = [8, 32], strides = [1, 1]} : vector<8x128xf32> to vector<8x32xf32>
    %21 = vector.extract_strided_slice %18 {offsets = [0, 32], sizes = [8, 32], strides = [1, 1]} : vector<8x128xf32> to vector<8x32xf32>
    %22 = vector.extract_strided_slice %19 {offsets = [0, 64], sizes = [8, 32], strides = [1, 1]} : vector<8x128xf32> to vector<8x32xf32>
    %23 = vector.extract_strided_slice %18 {offsets = [0, 96], sizes = [8, 32], strides = [1, 1]} : vector<8x128xf32> to vector<8x32xf32>
    %24 = arith.mulf %21, %8 : vector<8x32xf32>
    %25 = arith.mulf %20, %22 : vector<8x32xf32>
    %26 = arith.addf %24, %25 : vector<8x32xf32>
    %27 = math.tanh %26 : vector<8x32xf32>
    %28 = arith.mulf %23, %27 : vector<8x32xf32>
    %29 = vector.extract_strided_slice %5 {offsets = [8, 0], sizes = [8, 128], strides = [1, 1]} : vector<64x128xf32> to vector<8x128xf32>
    %cst_15 = arith.constant dense<0.000000e+00> : vector<8x128xf32>
    %30 = tpu.matmul %28, %6, %cst_15 {dimension_numbers = #tpu.dot_dimension_numbers<[1], [0], [0], [1], [0, 0, 1, 1], [], []>} : vector<8x32xf32>, vector<32x128xf32>, vector<8x128xf32> -> vector<8x128xf32>
    %31 = arith.addf %29, %30 : vector<8x128xf32>
    %cst_16 = arith.constant 5.000000e-01 : f32
    %32 = vector.broadcast %cst_16 : f32 to vector<8x128xf32>
    %33 = arith.mulf %32, %31 : vector<8x128xf32>
    %34 = math.tanh %33 : vector<8x128xf32>
    %cst_17 = arith.constant 1.000000e+00 : f32
    %35 = vector.broadcast %cst_17 : f32 to vector<8x128xf32>
    %36 = arith.addf %34, %35 : vector<8x128xf32>
    %cst_18 = arith.constant 5.000000e-01 : f32
    %37 = vector.broadcast %cst_18 : f32 to vector<8x128xf32>
    %38 = arith.mulf %37, %36 : vector<8x128xf32>
    %39 = math.tanh %31 : vector<8x128xf32>
    %40 = vector.extract_strided_slice %38 {offsets = [0, 0], sizes = [8, 32], strides = [1, 1]} : vector<8x128xf32> to vector<8x32xf32>
    %41 = vector.extract_strided_slice %38 {offsets = [0, 32], sizes = [8, 32], strides = [1, 1]} : vector<8x128xf32> to vector<8x32xf32>
    %42 = vector.extract_strided_slice %39 {offsets = [0, 64], sizes = [8, 32], strides = [1, 1]} : vector<8x128xf32> to vector<8x32xf32>
    %43 = vector.extract_strided_slice %38 {offsets = [0, 96], sizes = [8, 32], strides = [1, 1]} : vector<8x128xf32> to vector<8x32xf32>
    %44 = arith.mulf %41, %26 : vector<8x32xf32>
    %45 = arith.mulf %40, %42 : vector<8x32xf32>
    %46 = arith.addf %44, %45 : vector<8x32xf32>
    %47 = math.tanh %46 : vector<8x32xf32>
    %48 = arith.mulf %43, %47 : vector<8x32xf32>
    %49 = vector.extract_strided_slice %5 {offsets = [16, 0], sizes = [8, 128], strides = [1, 1]} : vector<64x128xf32> to vector<8x128xf32>
    %cst_19 = arith.constant dense<0.000000e+00> : vector<8x128xf32>
    %50 = tpu.matmul %48, %6, %cst_19 {dimension_numbers = #tpu.dot_dimension_numbers<[1], [0], [0], [1], [0, 0, 1, 1], [], []>} : vector<8x32xf32>, vector<32x128xf32>, vector<8x128xf32> -> vector<8x128xf32>
    %51 = arith.addf %49, %50 : vector<8x128xf32>
    %cst_20 = arith.constant 5.000000e-01 : f32
    %52 = vector.broadcast %cst_20 : f32 to vector<8x128xf32>
    %53 = arith.mulf %52, %51 : vector<8x128xf32>
    %54 = math.tanh %53 : vector<8x128xf32>
    %cst_21 = arith.constant 1.000000e+00 : f32
    %55 = vector.broadcast %cst_21 : f32 to vector<8x128xf32>
    %56 = arith.addf %54, %55 : vector<8x128xf32>
    %cst_22 = arith.constant 5.000000e-01 : f32
    %57 = vector.broadcast %cst_22 : f32 to vector<8x128xf32>
    %58 = arith.mulf %57, %56 : vector<8x128xf32>
    %59 = math.tanh %51 : vector<8x128xf32>
    %60 = vector.extract_strided_slice %58 {offsets = [0, 0], sizes = [8, 32], strides = [1, 1]} : vector<8x128xf32> to vector<8x32xf32>
    %61 = vector.extract_strided_slice %58 {offsets = [0, 32], sizes = [8, 32], strides = [1, 1]} : vector<8x128xf32> to vector<8x32xf32>
    %62 = vector.extract_strided_slice %59 {offsets = [0, 64], sizes = [8, 32], strides = [1, 1]} : vector<8x128xf32> to vector<8x32xf32>
    %63 = vector.extract_strided_slice %58 {offsets = [0, 96], sizes = [8, 32], strides = [1, 1]} : vector<8x128xf32> to vector<8x32xf32>
    %64 = arith.mulf %61, %46 : vector<8x32xf32>
    %65 = arith.mulf %60, %62 : vector<8x32xf32>
    %66 = arith.addf %64, %65 : vector<8x32xf32>
    %67 = math.tanh %66 : vector<8x32xf32>
    %68 = arith.mulf %63, %67 : vector<8x32xf32>
    %69 = vector.extract_strided_slice %5 {offsets = [24, 0], sizes = [8, 128], strides = [1, 1]} : vector<64x128xf32> to vector<8x128xf32>
    %cst_23 = arith.constant dense<0.000000e+00> : vector<8x128xf32>
    %70 = tpu.matmul %68, %6, %cst_23 {dimension_numbers = #tpu.dot_dimension_numbers<[1], [0], [0], [1], [0, 0, 1, 1], [], []>} : vector<8x32xf32>, vector<32x128xf32>, vector<8x128xf32> -> vector<8x128xf32>
    %71 = arith.addf %69, %70 : vector<8x128xf32>
    %cst_24 = arith.constant 5.000000e-01 : f32
    %72 = vector.broadcast %cst_24 : f32 to vector<8x128xf32>
    %73 = arith.mulf %72, %71 : vector<8x128xf32>
    %74 = math.tanh %73 : vector<8x128xf32>
    %cst_25 = arith.constant 1.000000e+00 : f32
    %75 = vector.broadcast %cst_25 : f32 to vector<8x128xf32>
    %76 = arith.addf %74, %75 : vector<8x128xf32>
    %cst_26 = arith.constant 5.000000e-01 : f32
    %77 = vector.broadcast %cst_26 : f32 to vector<8x128xf32>
    %78 = arith.mulf %77, %76 : vector<8x128xf32>
    %79 = math.tanh %71 : vector<8x128xf32>
    %80 = vector.extract_strided_slice %78 {offsets = [0, 0], sizes = [8, 32], strides = [1, 1]} : vector<8x128xf32> to vector<8x32xf32>
    %81 = vector.extract_strided_slice %78 {offsets = [0, 32], sizes = [8, 32], strides = [1, 1]} : vector<8x128xf32> to vector<8x32xf32>
    %82 = vector.extract_strided_slice %79 {offsets = [0, 64], sizes = [8, 32], strides = [1, 1]} : vector<8x128xf32> to vector<8x32xf32>
    %83 = vector.extract_strided_slice %78 {offsets = [0, 96], sizes = [8, 32], strides = [1, 1]} : vector<8x128xf32> to vector<8x32xf32>
    %84 = arith.mulf %81, %66 : vector<8x32xf32>
    %85 = arith.mulf %80, %82 : vector<8x32xf32>
    %86 = arith.addf %84, %85 : vector<8x32xf32>
    %87 = math.tanh %86 : vector<8x32xf32>
    %88 = arith.mulf %83, %87 : vector<8x32xf32>
    %89 = vector.extract_strided_slice %5 {offsets = [32, 0], sizes = [8, 128], strides = [1, 1]} : vector<64x128xf32> to vector<8x128xf32>
    %cst_27 = arith.constant dense<0.000000e+00> : vector<8x128xf32>
    %90 = tpu.matmul %88, %6, %cst_27 {dimension_numbers = #tpu.dot_dimension_numbers<[1], [0], [0], [1], [0, 0, 1, 1], [], []>} : vector<8x32xf32>, vector<32x128xf32>, vector<8x128xf32> -> vector<8x128xf32>
    %91 = arith.addf %89, %90 : vector<8x128xf32>
    %cst_28 = arith.constant 5.000000e-01 : f32
    %92 = vector.broadcast %cst_28 : f32 to vector<8x128xf32>
    %93 = arith.mulf %92, %91 : vector<8x128xf32>
    %94 = math.tanh %93 : vector<8x128xf32>
    %cst_29 = arith.constant 1.000000e+00 : f32
    %95 = vector.broadcast %cst_29 : f32 to vector<8x128xf32>
    %96 = arith.addf %94, %95 : vector<8x128xf32>
    %cst_30 = arith.constant 5.000000e-01 : f32
    %97 = vector.broadcast %cst_30 : f32 to vector<8x128xf32>
    %98 = arith.mulf %97, %96 : vector<8x128xf32>
    %99 = math.tanh %91 : vector<8x128xf32>
    %100 = vector.extract_strided_slice %98 {offsets = [0, 0], sizes = [8, 32], strides = [1, 1]} : vector<8x128xf32> to vector<8x32xf32>
    %101 = vector.extract_strided_slice %98 {offsets = [0, 32], sizes = [8, 32], strides = [1, 1]} : vector<8x128xf32> to vector<8x32xf32>
    %102 = vector.extract_strided_slice %99 {offsets = [0, 64], sizes = [8, 32], strides = [1, 1]} : vector<8x128xf32> to vector<8x32xf32>
    %103 = vector.extract_strided_slice %98 {offsets = [0, 96], sizes = [8, 32], strides = [1, 1]} : vector<8x128xf32> to vector<8x32xf32>
    %104 = arith.mulf %101, %86 : vector<8x32xf32>
    %105 = arith.mulf %100, %102 : vector<8x32xf32>
    %106 = arith.addf %104, %105 : vector<8x32xf32>
    %107 = math.tanh %106 : vector<8x32xf32>
    %108 = arith.mulf %103, %107 : vector<8x32xf32>
    %109 = vector.extract_strided_slice %5 {offsets = [40, 0], sizes = [8, 128], strides = [1, 1]} : vector<64x128xf32> to vector<8x128xf32>
    %cst_31 = arith.constant dense<0.000000e+00> : vector<8x128xf32>
    %110 = tpu.matmul %108, %6, %cst_31 {dimension_numbers = #tpu.dot_dimension_numbers<[1], [0], [0], [1], [0, 0, 1, 1], [], []>} : vector<8x32xf32>, vector<32x128xf32>, vector<8x128xf32> -> vector<8x128xf32>
    %111 = arith.addf %109, %110 : vector<8x128xf32>
    %cst_32 = arith.constant 5.000000e-01 : f32
    %112 = vector.broadcast %cst_32 : f32 to vector<8x128xf32>
    %113 = arith.mulf %112, %111 : vector<8x128xf32>
    %114 = math.tanh %113 : vector<8x128xf32>
    %cst_33 = arith.constant 1.000000e+00 : f32
    %115 = vector.broadcast %cst_33 : f32 to vector<8x128xf32>
    %116 = arith.addf %114, %115 : vector<8x128xf32>
    %cst_34 = arith.constant 5.000000e-01 : f32
    %117 = vector.broadcast %cst_34 : f32 to vector<8x128xf32>
    %118 = arith.mulf %117, %116 : vector<8x128xf32>
    %119 = math.tanh %111 : vector<8x128xf32>
    %120 = vector.extract_strided_slice %118 {offsets = [0, 0], sizes = [8, 32], strides = [1, 1]} : vector<8x128xf32> to vector<8x32xf32>
    %121 = vector.extract_strided_slice %118 {offsets = [0, 32], sizes = [8, 32], strides = [1, 1]} : vector<8x128xf32> to vector<8x32xf32>
    %122 = vector.extract_strided_slice %119 {offsets = [0, 64], sizes = [8, 32], strides = [1, 1]} : vector<8x128xf32> to vector<8x32xf32>
    %123 = vector.extract_strided_slice %118 {offsets = [0, 96], sizes = [8, 32], strides = [1, 1]} : vector<8x128xf32> to vector<8x32xf32>
    %124 = arith.mulf %121, %106 : vector<8x32xf32>
    %125 = arith.mulf %120, %122 : vector<8x32xf32>
    %126 = arith.addf %124, %125 : vector<8x32xf32>
    %127 = math.tanh %126 : vector<8x32xf32>
    %128 = arith.mulf %123, %127 : vector<8x32xf32>
    %129 = vector.extract_strided_slice %5 {offsets = [48, 0], sizes = [8, 128], strides = [1, 1]} : vector<64x128xf32> to vector<8x128xf32>
    %cst_35 = arith.constant dense<0.000000e+00> : vector<8x128xf32>
    %130 = tpu.matmul %128, %6, %cst_35 {dimension_numbers = #tpu.dot_dimension_numbers<[1], [0], [0], [1], [0, 0, 1, 1], [], []>} : vector<8x32xf32>, vector<32x128xf32>, vector<8x128xf32> -> vector<8x128xf32>
    %131 = arith.addf %129, %130 : vector<8x128xf32>
    %cst_36 = arith.constant 5.000000e-01 : f32
    %132 = vector.broadcast %cst_36 : f32 to vector<8x128xf32>
    %133 = arith.mulf %132, %131 : vector<8x128xf32>
    %134 = math.tanh %133 : vector<8x128xf32>
    %cst_37 = arith.constant 1.000000e+00 : f32
    %135 = vector.broadcast %cst_37 : f32 to vector<8x128xf32>
    %136 = arith.addf %134, %135 : vector<8x128xf32>
    %cst_38 = arith.constant 5.000000e-01 : f32
    %137 = vector.broadcast %cst_38 : f32 to vector<8x128xf32>
    %138 = arith.mulf %137, %136 : vector<8x128xf32>
    %139 = math.tanh %131 : vector<8x128xf32>
    %140 = vector.extract_strided_slice %138 {offsets = [0, 0], sizes = [8, 32], strides = [1, 1]} : vector<8x128xf32> to vector<8x32xf32>
    %141 = vector.extract_strided_slice %138 {offsets = [0, 32], sizes = [8, 32], strides = [1, 1]} : vector<8x128xf32> to vector<8x32xf32>
    %142 = vector.extract_strided_slice %139 {offsets = [0, 64], sizes = [8, 32], strides = [1, 1]} : vector<8x128xf32> to vector<8x32xf32>
    %143 = vector.extract_strided_slice %138 {offsets = [0, 96], sizes = [8, 32], strides = [1, 1]} : vector<8x128xf32> to vector<8x32xf32>
    %144 = arith.mulf %141, %126 : vector<8x32xf32>
    %145 = arith.mulf %140, %142 : vector<8x32xf32>
    %146 = arith.addf %144, %145 : vector<8x32xf32>
    %147 = math.tanh %146 : vector<8x32xf32>
    %148 = arith.mulf %143, %147 : vector<8x32xf32>
    %149 = vector.extract_strided_slice %5 {offsets = [56, 0], sizes = [8, 128], strides = [1, 1]} : vector<64x128xf32> to vector<8x128xf32>
    %cst_39 = arith.constant dense<0.000000e+00> : vector<8x128xf32>
    %150 = tpu.matmul %148, %6, %cst_39 {dimension_numbers = #tpu.dot_dimension_numbers<[1], [0], [0], [1], [0, 0, 1, 1], [], []>} : vector<8x32xf32>, vector<32x128xf32>, vector<8x128xf32> -> vector<8x128xf32>
    %151 = arith.addf %149, %150 : vector<8x128xf32>
    %cst_40 = arith.constant 5.000000e-01 : f32
    %152 = vector.broadcast %cst_40 : f32 to vector<8x128xf32>
    %153 = arith.mulf %152, %151 : vector<8x128xf32>
    %154 = math.tanh %153 : vector<8x128xf32>
    %cst_41 = arith.constant 1.000000e+00 : f32
    %155 = vector.broadcast %cst_41 : f32 to vector<8x128xf32>
    %156 = arith.addf %154, %155 : vector<8x128xf32>
    %cst_42 = arith.constant 5.000000e-01 : f32
    %157 = vector.broadcast %cst_42 : f32 to vector<8x128xf32>
    %158 = arith.mulf %157, %156 : vector<8x128xf32>
    %159 = math.tanh %151 : vector<8x128xf32>
    %160 = vector.extract_strided_slice %158 {offsets = [0, 0], sizes = [8, 32], strides = [1, 1]} : vector<8x128xf32> to vector<8x32xf32>
    %161 = vector.extract_strided_slice %158 {offsets = [0, 32], sizes = [8, 32], strides = [1, 1]} : vector<8x128xf32> to vector<8x32xf32>
    %162 = vector.extract_strided_slice %159 {offsets = [0, 64], sizes = [8, 32], strides = [1, 1]} : vector<8x128xf32> to vector<8x32xf32>
    %163 = vector.extract_strided_slice %158 {offsets = [0, 96], sizes = [8, 32], strides = [1, 1]} : vector<8x128xf32> to vector<8x32xf32>
    %164 = arith.mulf %161, %146 : vector<8x32xf32>
    %165 = arith.mulf %160, %162 : vector<8x32xf32>
    %166 = arith.addf %164, %165 : vector<8x32xf32>
    %167 = math.tanh %166 : vector<8x32xf32>
    %168 = arith.mulf %163, %167 : vector<8x32xf32>
    %c0_43 = arith.constant 0 : index
    %c0_44 = arith.constant 0 : index
    %169 = vector.load %arg9[%c0_43, %c0_44] : memref<8x32xf32, #tpu.memory_space<vmem>>, vector<8x32xf32>
    tpu.vector_store %arg9[%c0_43, %c0_44], %168 {strides = array<i32>} : memref<8x32xf32, #tpu.memory_space<vmem>>, vector<8x32xf32>,
    %c0_45 = arith.constant 0 : index
    %c0_46 = arith.constant 0 : index
    %170 = vector.load %arg10[%c0_45, %c0_46] : memref<8x32xf32, #tpu.memory_space<vmem>>, vector<8x32xf32>
    tpu.vector_store %arg10[%c0_45, %c0_46], %166 {strides = array<i32>} : memref<8x32xf32, #tpu.memory_space<vmem>>, vector<8x32xf32>,
    %c0_47 = arith.constant 0 : index
    %c0_48 = arith.constant 0 : index
    %171 = vector.load %arg6[%c0_47, %c0_48] : memref<32x128xf32, #tpu.memory_space<vmem>>, vector<32x128xf32>
    %cst_49 = arith.constant dense<0.000000e+00> : vector<8x128xf32>
    %172 = tpu.matmul %168, %171, %cst_49 {dimension_numbers = #tpu.dot_dimension_numbers<[1], [0], [0], [1], [0, 0, 1, 1], [], []>} : vector<8x32xf32>, vector<32x128xf32>, vector<8x128xf32> -> vector<8x128xf32>
    %c0_50 = arith.constant 0 : index
    %c0_51 = arith.constant 0 : index
    %173 = vector.load %arg7[%c0_50, %c0_51] : memref<1x128xf32, #tpu.memory_space<vmem>>, vector<1x128xf32>
    %174 = vector.broadcast %173 : vector<1x128xf32> to vector<8x128xf32>
    %175 = arith.addf %172, %174 : vector<8x128xf32>
    %cst_52 = arith.constant dense<0xFF800000> : vector<8xf32>
    %176 = vector.multi_reduction <maximumf>, %175, %cst_52 [1] : vector<8x128xf32> to vector<8xf32>
    %177 = vector.shape_cast %176 : vector<8xf32> to vector<8x1xf32>
    %178 = vector.broadcast %177 : vector<8x1xf32> to vector<8x128xf32>
    %179 = arith.subf %175, %178 : vector<8x128xf32>
    %180 = math.exp %179 : vector<8x128xf32>
    %cst_53 = arith.constant dense<0.000000e+00> : vector<8xf32>
    %181 = vector.multi_reduction <add>, %180, %cst_53 [1] : vector<8x128xf32> to vector<8xf32>
    %182 = vector.shape_cast %181 : vector<8xf32> to vector<8x1xf32>
    %183 = math.log %182 : vector<8x1xf32>
    %184 = vector.broadcast %183 : vector<8x1xf32> to vector<8x128xf32>
    %185 = arith.subf %179, %184 : vector<8x128xf32>
    %c0_54 = arith.constant 0 : index
    %c0_55 = arith.constant 0 : index
    %186 = vector.load %arg8[%c0_54, %c0_55] : memref<8x128xf32, #tpu.memory_space<vmem>>, vector<8x128xf32>
    tpu.vector_store %arg8[%c0_54, %c0_55], %185 {strides = array<i32>} : memref<8x128xf32, #tpu.memory_space<vmem>>, vector<8x128xf32>,
    return
  }
}

</mosaic_0001>

<llo_original>
// kernel: tpu_custom_call.1
$region0: #{tpu_custom_call.1}
  #allocation0 [shape = 'u32[]', space=smem, size = 0x4, offset = 0x4, fixed_abs, tag = 'smem constant byte address 0x4 - core index']
  #allocation1 [shape = 'u32[144,128]{1,0:T(1,128)}', space=vmem, size = 0x12000, scoped, tag = 'internal scratch']
  %s0 = inlined_call_operand.hbm [shape: f32[64,64], index: 0, kind: input, shape index: {}]
  %s1 = inlined_call_operand.hbm [shape: f32[64,128], index: 1, kind: input, shape index: {}]
  %s2 = inlined_call_operand.vmem [shape: f32[1,128], index: 2, kind: input, shape index: {}]
  %s3 = inlined_call_operand.hbm [shape: f32[32,128], index: 3, kind: input, shape index: {}]
  %s4 = inlined_call_operand.vmem [shape: f32[8,32], index: 4, kind: input, shape index: {}]
  %s5 = inlined_call_operand.vmem [shape: f32[8,32], index: 5, kind: input, shape index: {}]
  %s6 = inlined_call_operand.hbm [shape: f32[32,128], index: 6, kind: input, shape index: {}]
  %s7 = inlined_call_operand.vmem [shape: f32[1,128], index: 7, kind: input, shape index: {}]
  %s8 = inlined_call_operand.hbm [shape: f32[8,128], index: 8, kind: output, shape index: {0}]
  %s9 = inlined_call_operand.hbm [shape: f32[8,32], index: 9, kind: output, shape index: {1}]
  %s10 = inlined_call_operand.hbm [shape: f32[8,32], index: 10, kind: output, shape index: {2}]
  %11 = xla_tuple %s8, %s9, %s10
  %s12 = sld [smem:[#allocation0]]
  $region74: #{tpu_custom_call.1} parent=0
    _
  %s14 = ssub.s32 1, %s12
  %s15 = scalar_select 0, %s14, %s12
  $region1: #{tpu_custom_call.1} parent=0
    #allocation2 [shape = 'u8[32768]{0}', space=vmem, size = 0x8000, scoped, tag = 'input window, operand 0, single buffered']
    #allocation3 [shape = 's32[1]{0}', space=sflag, size = 0x4, scoped, tag = 'scoped memory for tpu_custom_call.1']
    #allocation4 [shape = 's32[1]{0}', space=sflag, size = 0x4, scoped, tag = 'scoped memory for tpu_custom_call.1']
    #allocation5 [shape = 'u8[32768]{0}', space=vmem, size = 0x8000, scoped, tag = 'input window, operand 1, single buffered']
    #allocation6 [shape = 's32[1]{0}', space=sflag, size = 0x4, scoped, tag = 'scoped memory for tpu_custom_call.1']
    #allocation7 [shape = 'u8[16384]{0}', space=vmem, size = 0x4000, scoped, tag = 'input window, operand 3, single buffered']
    #allocation8 [shape = 'u8[16384]{0}', space=vmem, size = 0x4000, scoped, tag = 'input window, operand 6, single buffered']
    #allocation9 [shape = 's32[1]{0}', space=sflag, size = 0x4, scoped, tag = 'scoped memory for tpu_custom_call.1']
    #allocation10 [shape = 'u8[4096]{0}', space=vmem, size = 0x1000, scoped, tag = 'output window, operand 0, single buffered']
    #allocation11 [shape = 'u8[4096]{0}', space=vmem, size = 0x1000, scoped, tag = 'output window, operand 1, single buffered']
    #allocation12 [shape = 's32[1]{0}', space=sflag, size = 0x4, scoped, tag = 'scoped memory for tpu_custom_call.1']
    #allocation13 [shape = 'u8[4096]{0}', space=vmem, size = 0x1000, scoped, tag = 'output window, operand 2, single buffered']
    %16 = vsyncpa [#allocation3], 0
    %17 = vsyncpa [#allocation6], 0
    %18 = vsyncpa [#allocation9], 0
    %19 = vsyncpa [#allocation4], 0
    %20 = vsyncpa [#allocation12], 0
    // Predicated region
    $region2: #{tpu_custom_call.1} parent=1 // pred_check
      _
    $region3: #{tpu_custom_call.1} parent=1 // pred_check_branch
      %22 = sbr.rel (0) target = $region5
    $region4: #{tpu_custom_call.1} parent=1 // pred_region
      %s24 = ssub.s32 1024, 1024
      %25 = vsyncadd [#allocation3], %s24
      %s26 = sshll.u32 [#allocation2], 4
      %s27 = int_to_ptr.vmem [resolvable:$true] %s26
      %32 = dma.hbm_to_vmem [thread:$0]  %s0, 1024, %s27, [#allocation3], 128, 128, 8
    $region5: #{tpu_custom_call.1} parent=1 // pred_fallthru
      _
    // Predicated region
    $region6: #{tpu_custom_call.1} parent=1 // pred_check
      _
    $region7: #{tpu_custom_call.1} parent=1 // pred_check_branch
      %34 = sbr.rel (0) target = $region9
    $region8: #{tpu_custom_call.1} parent=1 // pred_region
      %s36 = ssub.s32 1024, 1024
      %37 = vsyncadd [#allocation6], %s36
      %s38 = sshll.u32 [#allocation5], 4
      %s39 = int_to_ptr.vmem [resolvable:$true] %s38
      %44 = dma.hbm_to_vmem [thread:$0]  %s1, 1024, %s39, [#allocation6], 128, 128, 8
    $region9: #{tpu_custom_call.1} parent=1 // pred_fallthru
      _
    // Predicated region
    $region10: #{tpu_custom_call.1} parent=1 // pred_check
      _
    $region11: #{tpu_custom_call.1} parent=1 // pred_check_branch
      %46 = sbr.rel (0) target = $region13
    $region12: #{tpu_custom_call.1} parent=1 // pred_region
      _
    $region13: #{tpu_custom_call.1} parent=1 // pred_fallthru
      _
    // Predicated region
    $region14: #{tpu_custom_call.1} parent=1 // pred_check
      _
    $region15: #{tpu_custom_call.1} parent=1 // pred_check_branch
      %48 = sbr.rel (0) target = $region17
    $region16: #{tpu_custom_call.1} parent=1 // pred_region
      %s50 = ssub.s32 512, 512
      %51 = vsyncadd [#allocation6], %s50
      %s52 = sshll.u32 [#allocation7], 4
      %s53 = int_to_ptr.vmem [resolvable:$true] %s52
      %58 = dma.hbm_to_vmem [thread:$0]  %s3, 512, %s53, [#allocation6], 128, 128, 8
    $region17: #{tpu_custom_call.1} parent=1 // pred_fallthru
      _
    // Predicated region
    $region18: #{tpu_custom_call.1} parent=1 // pred_check
      _
    $region19: #{tpu_custom_call.1} parent=1 // pred_check_branch
      %60 = sbr.rel (0) target = $region21
    $region20: #{tpu_custom_call.1} parent=1 // pred_region
      _
    $region21: #{tpu_custom_call.1} parent=1 // pred_fallthru
      _
    // Predicated region
    $region22: #{tpu_custom_call.1} parent=1 // pred_check
      _
    $region23: #{tpu_custom_call.1} parent=1 // pred_check_branch
      %62 = sbr.rel (0) target = $region25
    $region24: #{tpu_custom_call.1} parent=1 // pred_region
      _
    $region25: #{tpu_custom_call.1} parent=1 // pred_fallthru
      _
    // Predicated region
    $region26: #{tpu_custom_call.1} parent=1 // pred_check
      _
    $region27: #{tpu_custom_call.1} parent=1 // pred_check_branch
      %64 = sbr.rel (0) target = $region29
    $region28: #{tpu_custom_call.1} parent=1 // pred_region
      %s66 = ssub.s32 512, 512
      %67 = vsyncadd [#allocation9], %s66
      %s68 = sshll.u32 [#allocation8], 4
      %s69 = int_to_ptr.vmem [resolvable:$true] %s68
      %74 = dma.hbm_to_vmem [thread:$0]  %s6, 512, %s69, [#allocation9], 128, 128, 8
    $region29: #{tpu_custom_call.1} parent=1 // pred_fallthru
      _
    // Predicated region
    $region30: #{tpu_custom_call.1} parent=1 // pred_check
      _
    $region31: #{tpu_custom_call.1} parent=1 // pred_check_branch
      %76 = sbr.rel (0) target = $region33
    $region32: #{tpu_custom_call.1} parent=1 // pred_region
      _
    $region33: #{tpu_custom_call.1} parent=1 // pred_fallthru
      _
    // Predicated region
    $region34: #{tpu_custom_call.1} parent=1 // pred_check
      _
    $region35: #{tpu_custom_call.1} parent=1 // pred_check_branch
      %78 = sbr.rel (0) target = $region37
    $region36: #{tpu_custom_call.1} parent=1 // pred_region
      %79 = dma.done [#allocation3], 1024
    $region37: #{tpu_custom_call.1} parent=1 // pred_fallthru
      _
    // Predicated region
    $region38: #{tpu_custom_call.1} parent=1 // pred_check
      _
    $region39: #{tpu_custom_call.1} parent=1 // pred_check_branch
      %81 = sbr.rel (0) target = $region41
    $region40: #{tpu_custom_call.1} parent=1 // pred_region
      %82 = dma.done [#allocation6], 1024
    $region41: #{tpu_custom_call.1} parent=1 // pred_fallthru
      _
    // Predicated region
    $region42: #{tpu_custom_call.1} parent=1 // pred_check
      _
    $region43: #{tpu_custom_call.1} parent=1 // pred_check_branch
      %84 = sbr.rel (0) target = $region45
    $region44: #{tpu_custom_call.1} parent=1 // pred_region
      %85 = dma.done [#allocation6], 512
    $region45: #{tpu_custom_call.1} parent=1 // pred_fallthru
      _
    // Predicated region
    $region46: #{tpu_custom_call.1} parent=1 // pred_check
      _
    $region47: #{tpu_custom_call.1} parent=1 // pred_check_branch
      %87 = sbr.rel (0) target = $region49
    $region48: #{tpu_custom_call.1} parent=1 // pred_region
      %88 = dma.done [#allocation9], 512
    $region49: #{tpu_custom_call.1} parent=1 // pred_fallthru
      _
    %v89 = vld [vmem:[#allocation2] sm:$0xff]
    %v90 = vld [vmem:[#allocation2 + $0x8] sm:$0xff]
    %v91 = vld [vmem:[#allocation2 + $0x10] sm:$0xff]
    %v92 = vld [vmem:[#allocation2 + $0x18] sm:$0xff]
    %v93 = vld [vmem:[#allocation2 + $0x20] sm:$0xff]
    %v94 = vld [vmem:[#allocation2 + $0x28] sm:$0xff]
    %v95 = vld [vmem:[#allocation2 + $0x30] sm:$0xff]
    %v96 = vld [vmem:[#allocation2 + $0x38] sm:$0xff]
    %v97 = vld [vmem:[#allocation5] sm:$0xff]
    %v98 = vld [vmem:[#allocation5 + $0x8] sm:$0xff]
    %v99 = vld [vmem:[#allocation5 + $0x10] sm:$0xff]
    %v100 = vld [vmem:[#allocation5 + $0x18] sm:$0xff]
    %v101 = vld [vmem:[#allocation5 + $0x20] sm:$0xff]
    %v102 = vld [vmem:[#allocation5 + $0x28] sm:$0xff]
    %v103 = vld [vmem:[#allocation5 + $0x30] sm:$0xff]
    %v104 = vld [vmem:[#allocation5 + $0x38] sm:$0xff]
    %v105 = vld [vmem:[%s2] sm:$0x1]
    %v107 = vlaneseq
    %v108 = vshrl.u32 %v107, 7
    %v109 = vsub.s32 0, %v108
    %v110 = vrot.slane %v105, %v109
    %vm112 = vcmask 523264
    %v114 = vsel %vm112, %v89, 0
    %v117 = vsel %vm112, %v90, 0
    %v120 = vsel %vm112, %v91, 0
    %v123 = vsel %vm112, %v92, 0
    %v126 = vsel %vm112, %v93, 0
    %v129 = vsel %vm112, %v94, 0
    %v132 = vsel %vm112, %v95, 0
    %v135 = vsel %vm112, %v96, 0
    %137 = vmatprep.subr.mxu0 0.0
    %138 = vmatpush1.msra.mxu0 %v97
    %139 = vmatprep.subr.mxu0 0.0
    %140 = vmatpush1.msra.mxu0 %v98
    %141 = vmatprep.subr.mxu0 0.0
    %142 = vmatpush1.msra.mxu0 %v99
    %143 = vmatprep.subr.mxu0 0.0
    %144 = vmatpush1.msra.mxu0 %v100
    %145 = vmatprep.subr.mxu0 0.0
    %146 = vmatpush1.msra.mxu0 %v101
    %147 = vmatprep.subr.mxu0 0.0
    %148 = vmatpush1.msra.mxu0 %v102
    %149 = vmatprep.subr.mxu0 0.0
    %150 = vmatpush1.msra.mxu0 %v103
    %151 = vmatprep.subr.mxu0 0.0
    %152 = vmatpush1.msra.mxu0 %v104
    %153 = vmatprep.subr.mxu0 0.0
    %154 = vmatpush1.msra.mxu0 0.0
    %155 = vmatprep.subr.mxu0 0.0
    %156 = vmatpush1.msra.mxu0 0.0
    %157 = vmatprep.subr.mxu0 0.0
    %158 = vmatpush1.msra.mxu0 0.0
    %159 = vmatprep.subr.mxu0 0.0
    %160 = vmatpush1.msra.mxu0 0.0
    %161 = vmatprep.subr.mxu0 0.0
    %162 = vmatpush1.msra.mxu0 0.0
    %163 = vmatprep.subr.mxu0 0.0
    %164 = vmatpush1.msra.mxu0 0.0
    %165 = vmatprep.subr.mxu0 0.0
    %166 = vmatpush1.msra.mxu0 0.0
    %167 = vmatprep.subr.mxu0 0.0
    %168 = vmatpush1.msra.mxu0 0.0
    %169 = vmatprep.subr.mxu0 0.0
    %170 = vmatpush1.msra.mxu0 0.0
    %171 = vmatprep.subr.mxu0 0.0
    %172 = vmatpush1.msra.mxu0 0.0
    %173 = vmatprep.subr.mxu0 0.0
    %174 = vmatpush1.msra.mxu0 0.0
    %175 = vmatprep.subr.mxu0 0.0
    %176 = vmatpush1.msra.mxu0 0.0
    %177 = vmatprep.subr.mxu0 0.0
    %178 = vmatpush1.msra.mxu0 0.0
    %179 = vmatprep.subr.mxu0 0.0
    %180 = vmatpush1.msra.mxu0 0.0
    %181 = vmatprep.subr.mxu0 0.0
    %182 = vmatpush1.msra.mxu0 0.0
    %183 = vmatprep.subr.mxu0 0.0
    %184 = vmatpush1.msra.mxu0 0.0
    %185 = vmatprep.subr.mxu0 0.0
    %186 = vmatpush1.msra.mxu0 0.0
    %187 = vmatprep.subr.mxu0 0.0
    %188 = vmatpush1.msra.mxu0 0.0
    %189 = vmatprep.subr.mxu0 0.0
    %190 = vmatpush1.msra.mxu0 0.0
    %191 = vmatprep.subr.mxu0 0.0
    %192 = vmatpush1.msra.mxu0 0.0
    %193 = vmatprep.subr.mxu0 0.0
    %194 = vmatpush1.msra.mxu0 0.0
    %195 = vmatprep.subr.mxu0 0.0
    %196 = vmatpush1.msra.mxu0 0.0
    %197 = vmatprep.subr.mxu0 0.0
    %198 = vmatpush1.msra.mxu0 0.0
    %199 = vmatprep.subr.mxu0 0.0
    %200 = vmatpush1.msra.mxu0 0.0
    %201 = vmatprep.mubr.f32.mxu0 0.0
    %202 = vmatmul.mubr.f32.gmra.mrb[0].mxu0 %v114
    %v203 = vpop.f32.mrb[0].mxu0
    %v204 = vadd.f32 %v110, %v203
    %v205 = vpop.f32.mrb[0].mxu0
    %206 = vmatprep.mubr.f32.mxu0 0.0
    %207 = vmatmul.mubr.f32.gmra.mrb[0].mxu0 %v117
    %v208 = vpop.f32.mrb[0].mxu0
    %v209 = vadd.f32 %v110, %v208
    %v210 = vpop.f32.mrb[0].mxu0
    %211 = vmatprep.mubr.f32.mxu0 0.0
    %212 = vmatmul.mubr.f32.gmra.mrb[0].mxu0 %v120
    %v213 = vpop.f32.mrb[0].mxu0
    %v214 = vadd.f32 %v110, %v213
    %v215 = vpop.f32.mrb[0].mxu0
    %216 = vmatprep.mubr.f32.mxu0 0.0
    %217 = vmatmul.mubr.f32.gmra.mrb[0].mxu0 %v123
    %v218 = vpop.f32.mrb[0].mxu0
    %v219 = vadd.f32 %v110, %v218
    %v220 = vpop.f32.mrb[0].mxu0
    %221 = vmatprep.mubr.f32.mxu0 0.0
    %222 = vmatmul.mubr.f32.gmra.mrb[0].mxu0 %v126
    %v223 = vpop.f32.mrb[0].mxu0
    %v224 = vadd.f32 %v110, %v223
    %v225 = vpop.f32.mrb[0].mxu0
    %226 = vmatprep.mubr.f32.mxu0 0.0
    %227 = vmatmul.mubr.f32.gmra.mrb[0].mxu0 %v129
    %v228 = vpop.f32.mrb[0].mxu0
    %v229 = vadd.f32 %v110, %v228
    %v230 = vpop.f32.mrb[0].mxu0
    %231 = vmatprep.mubr.f32.mxu0 0.0
    %232 = vmatmul.mubr.f32.gmra.mrb[0].mxu0 %v132
    %v233 = vpop.f32.mrb[0].mxu0
    %v234 = vadd.f32 %v110, %v233
    %v235 = vpop.f32.mrb[0].mxu0
    %236 = vmatprep.mubr.f32.mxu0 0.0
    %237 = vmatmul.mubr.f32.gmra.mrb[0].mxu0 %v135
    %v238 = vpop.f32.mrb[0].mxu0
    %v239 = vadd.f32 %v110, %v238
    %v240 = vpop.f32.mrb[0].mxu0
    %241 = vdwg.mxu0
    %v242 = vld [vmem:[#allocation7] sm:$0xff]
    %v243 = vld [vmem:[#allocation7 + $0x8] sm:$0xff]
    %v244 = vld [vmem:[#allocation7 + $0x10] sm:$0xff]
    %v245 = vld [vmem:[#allocation7 + $0x18] sm:$0xff]
    %v246 = vld [vmem:[%s4] sm:$0xff]
    %v247 = vld [vmem:[%s5] sm:$0xff]
    %vm248 = vcmask 261120
    %v250 = vsel %vm248, %v246, 0
    %252 = vmatprep.subr.mxu0 0.0
    %253 = vmatpush1.msra.mxu0 %v242
    %254 = vmatprep.subr.mxu0 0.0
    %255 = vmatpush1.msra.mxu0 %v243
    %256 = vmatprep.subr.mxu0 0.0
    %257 = vmatpush1.msra.mxu0 %v244
    %258 = vmatprep.subr.mxu0 0.0
    %259 = vmatpush1.msra.mxu0 %v245
    %260 = vmatprep.subr.mxu0 0.0
    %261 = vmatpush1.msra.mxu0 0.0
    %262 = vmatprep.subr.mxu0 0.0
    %263 = vmatpush1.msra.mxu0 0.0
    %264 = vmatprep.subr.mxu0 0.0
    %265 = vmatpush1.msra.mxu0 0.0
    %266 = vmatprep.subr.mxu0 0.0
    %267 = vmatpush1.msra.mxu0 0.0
    %268 = vmatprep.subr.mxu0 0.0
    %269 = vmatpush1.msra.mxu0 0.0
    %270 = vmatprep.subr.mxu0 0.0
    %271 = vmatpush1.msra.mxu0 0.0
    %272 = vmatprep.subr.mxu0 0.0
    %273 = vmatpush1.msra.mxu0 0.0
    %274 = vmatprep.subr.mxu0 0.0
    %275 = vmatpush1.msra.mxu0 0.0
    %276 = vmatprep.subr.mxu0 0.0
    %277 = vmatpush1.msra.mxu0 0.0
    %278 = vmatprep.subr.mxu0 0.0
    %279 = vmatpush1.msra.mxu0 0.0
    %280 = vmatprep.subr.mxu0 0.0
    %281 = vmatpush1.msra.mxu0 0.0
    %282 = vmatprep.subr.mxu0 0.0
    %283 = vmatpush1.msra.mxu0 0.0
    %284 = vmatprep.subr.mxu0 0.0
    %285 = vmatpush1.msra.mxu0 0.0
    %286 = vmatprep.subr.mxu0 0.0
    %287 = vmatpush1.msra.mxu0 0.0
    %288 = vmatprep.subr.mxu0 0.0
    %289 = vmatpush1.msra.mxu0 0.0
    %290 = vmatprep.subr.mxu0 0.0
    %291 = vmatpush1.msra.mxu0 0.0
    %292 = vmatprep.subr.mxu0 0.0
    %293 = vmatpush1.msra.mxu0 0.0
    %294 = vmatprep.subr.mxu0 0.0
    %295 = vmatpush1.msra.mxu0 0.0
    %296 = vmatprep.subr.mxu0 0.0
    %297 = vmatpush1.msra.mxu0 0.0
    %298 = vmatprep.subr.mxu0 0.0
    %299 = vmatpush1.msra.mxu0 0.0
    %300 = vmatprep.subr.mxu0 0.0
    %301 = vmatpush1.msra.mxu0 0.0
    %302 = vmatprep.subr.mxu0 0.0
    %303 = vmatpush1.msra.mxu0 0.0
    %304 = vmatprep.subr.mxu0 0.0
    %305 = vmatpush1.msra.mxu0 0.0
    %306 = vmatprep.subr.mxu0 0.0
    %307 = vmatpush1.msra.mxu0 0.0
    %308 = vmatprep.subr.mxu0 0.0
    %309 = vmatpush1.msra.mxu0 0.0
    %310 = vmatprep.subr.mxu0 0.0
    %311 = vmatpush1.msra.mxu0 0.0
    %312 = vmatprep.subr.mxu0 0.0
    %313 = vmatpush1.msra.mxu0 0.0
    %314 = vmatprep.subr.mxu0 0.0
    %315 = vmatpush1.msra.mxu0 0.0
    %316 = vmatprep.mubr.f32.mxu0 0.0
    %317 = vmatmul.mubr.f32.gmra.mrb[0].mxu0 %v250
    %v318 = vpop.f32.mrb[0].mxu0
    %v319 = vadd.f32 0.0, %v318
    %v320 = vpop.f32.mrb[0].mxu0
    %321 = vdwg.mxu0
    %v322 = vadd.f32 %v204, %v319
    %v323 = vmul.f32 %v322, 0.5
    %v324 = vtanh.pop %v323
    %v325 = vadd.f32 %v324, 1.0
    %v326 = vmul.f32 %v325, 0.5
    %v327 = vtanh.pop %v322
    %329 = vrot.lane.b32.xlu0 %v247, 32
    %v330 = vpop.permute.xlu0 %329
    %v332 = vmul.f32 %v326, %v330
    %334 = vrot.lane.b32.xlu0 %v327, 64
    %v335 = vpop.permute.xlu0 %334
    %v337 = vmul.f32 %v326, %v335
    %339 = vrot.lane.b32.xlu0 %v337, 32
    %v340 = vpop.permute.xlu0 %339
    %v342 = vadd.f32 %v332, %v340
    %v343 = vtanh.pop %v342
    %345 = vrot.lane.b32.xlu0 %v343, 64
    %v346 = vpop.permute.xlu0 %345
    %v348 = vmul.f32 %v326, %v346
    %350 = vrot.lane.b32.xlu0 %v348, 32
    %v351 = vpop.permute.xlu0 %350
    %v352 = vsel %vm248, %v351, 0
    %354 = vmatprep.subr.mxu0 0.0
    %355 = vmatpush1.msra.mxu0 %v242
    %356 = vmatprep.subr.mxu0 0.0
    %357 = vmatpush1.msra.mxu0 %v243
    %358 = vmatprep.subr.mxu0 0.0
    %359 = vmatpush1.msra.mxu0 %v244
    %360 = vmatprep.subr.mxu0 0.0
    %361 = vmatpush1.msra.mxu0 %v245
    %362 = vmatprep.subr.mxu0 0.0
    %363 = vmatpush1.msra.mxu0 0.0
    %364 = vmatprep.subr.mxu0 0.0
    %365 = vmatpush1.msra.mxu0 0.0
    %366 = vmatprep.subr.mxu0 0.0
    %367 = vmatpush1.msra.mxu0 0.0
    %368 = vmatprep.subr.mxu0 0.0
    %369 = vmatpush1.msra.mxu0 0.0
    %370 = vmatprep.subr.mxu0 0.0
    %371 = vmatpush1.msra.mxu0 0.0
    %372 = vmatprep.subr.mxu0 0.0
    %373 = vmatpush1.msra.mxu0 0.0
    %374 = vmatprep.subr.mxu0 0.0
    %375 = vmatpush1.msra.mxu0 0.0
    %376 = vmatprep.subr.mxu0 0.0
    %377 = vmatpush1.msra.mxu0 0.0
    %378 = vmatprep.subr.mxu0 0.0
    %379 = vmatpush1.msra.mxu0 0.0
    %380 = vmatprep.subr.mxu0 0.0
    %381 = vmatpush1.msra.mxu0 0.0
    %382 = vmatprep.subr.mxu0 0.0
    %383 = vmatpush1.msra.mxu0 0.0
    %384 = vmatprep.subr.mxu0 0.0
    %385 = vmatpush1.msra.mxu0 0.0
    %386 = vmatprep.subr.mxu0 0.0
    %387 = vmatpush1.msra.mxu0 0.0
    %388 = vmatprep.subr.mxu0 0.0
    %389 = vmatpush1.msra.mxu0 0.0
    %390 = vmatprep.subr.mxu0 0.0
    %391 = vmatpush1.msra.mxu0 0.0
    %392 = vmatprep.subr.mxu0 0.0
    %393 = vmatpush1.msra.mxu0 0.0
    %394 = vmatprep.subr.mxu0 0.0
    %395 = vmatpush1.msra.mxu0 0.0
    %396 = vmatprep.subr.mxu0 0.0
    %397 = vmatpush1.msra.mxu0 0.0
    %398 = vmatprep.subr.mxu0 0.0
    %399 = vmatpush1.msra.mxu0 0.0
    %400 = vmatprep.subr.mxu0 0.0
    %401 = vmatpush1.msra.mxu0 0.0
    %402 = vmatprep.subr.mxu0 0.0
    %403 = vmatpush1.msra.mxu0 0.0
    %404 = vmatprep.subr.mxu0 0.0
    %405 = vmatpush1.msra.mxu0 0.0
    %406 = vmatprep.subr.mxu0 0.0
    %407 = vmatpush1.msra.mxu0 0.0
    %408 = vmatprep.subr.mxu0 0.0
    %409 = vmatpush1.msra.mxu0 0.0
    %410 = vmatprep.subr.mxu0 0.0
    %411 = vmatpush1.msra.mxu0 0.0
    %412 = vmatprep.subr.mxu0 0.0
    %413 = vmatpush1.msra.mxu0 0.0
    %414 = vmatprep.subr.mxu0 0.0
    %415 = vmatpush1.msra.mxu0 0.0
    %416 = vmatprep.subr.mxu0 0.0
    %417 = vmatpush1.msra.mxu0 0.0
    %418 = vmatprep.mubr.f32.mxu0 0.0
    %419 = vmatmul.mubr.f32.gmra.mrb[0].mxu0 %v352
    %v420 = vpop.f32.mrb[0].mxu0
    %v421 = vadd.f32 0.0, %v420
    %v422 = vpop.f32.mrb[0].mxu0
    %423 = vdwg.mxu0
    %v424 = vadd.f32 %v209, %v421
    %v425 = vmul.f32 %v424, 0.5
    %v426 = vtanh.pop %v425
    %v427 = vadd.f32 %v426, 1.0
    %v428 = vmul.f32 %v427, 0.5
    %v429 = vtanh.pop %v424
    %v430 = vmul.f32 %v428, %v342
    %432 = vrot.lane.b32.xlu0 %v429, 64
    %v433 = vpop.permute.xlu0 %432
    %v435 = vmul.f32 %v428, %v433
    %437 = vrot.lane.b32.xlu0 %v435, 32
    %v438 = vpop.permute.xlu0 %437
    %v440 = vadd.f32 %v430, %v438
    %v441 = vtanh.pop %v440
    %443 = vrot.lane.b32.xlu0 %v441, 64
    %v444 = vpop.permute.xlu0 %443
    %v446 = vmul.f32 %v428, %v444
    %448 = vrot.lane.b32.xlu0 %v446, 32
    %v449 = vpop.permute.xlu0 %448
    %v450 = vsel %vm248, %v449, 0
    %452 = vmatprep.subr.mxu0 0.0
    %453 = vmatpush1.msra.mxu0 %v242
    %454 = vmatprep.subr.mxu0 0.0
    %455 = vmatpush1.msra.mxu0 %v243
    %456 = vmatprep.subr.mxu0 0.0
    %457 = vmatpush1.msra.mxu0 %v244
    %458 = vmatprep.subr.mxu0 0.0
    %459 = vmatpush1.msra.mxu0 %v245
    %460 = vmatprep.subr.mxu0 0.0
    %461 = vmatpush1.msra.mxu0 0.0
    %462 = vmatprep.subr.mxu0 0.0
    %463 = vmatpush1.msra.mxu0 0.0
    %464 = vmatprep.subr.mxu0 0.0
    %465 = vmatpush1.msra.mxu0 0.0
    %466 = vmatprep.subr.mxu0 0.0
    %467 = vmatpush1.msra.mxu0 0.0
    %468 = vmatprep.subr.mxu0 0.0
    %469 = vmatpush1.msra.mxu0 0.0
    %470 = vmatprep.subr.mxu0 0.0
    %471 = vmatpush1.msra.mxu0 0.0
    %472 = vmatprep.subr.mxu0 0.0
    %473 = vmatpush1.msra.mxu0 0.0
    %474 = vmatprep.subr.mxu0 0.0
    %475 = vmatpush1.msra.mxu0 0.0
    %476 = vmatprep.subr.mxu0 0.0
    %477 = vmatpush1.msra.mxu0 0.0
    %478 = vmatprep.subr.mxu0 0.0
    %479 = vmatpush1.msra.mxu0 0.0
    %480 = vmatprep.subr.mxu0 0.0
    %481 = vmatpush1.msra.mxu0 0.0
    %482 = vmatprep.subr.mxu0 0.0
    %483 = vmatpush1.msra.mxu0 0.0
    %484 = vmatprep.subr.mxu0 0.0
    %485 = vmatpush1.msra.mxu0 0.0
    %486 = vmatprep.subr.mxu0 0.0
    %487 = vmatpush1.msra.mxu0 0.0
    %488 = vmatprep.subr.mxu0 0.0
    %489 = vmatpush1.msra.mxu0 0.0
    %490 = vmatprep.subr.mxu0 0.0
    %491 = vmatpush1.msra.mxu0 0.0
    %492 = vmatprep.subr.mxu0 0.0
    %493 = vmatpush1.msra.mxu0 0.0
    %494 = vmatprep.subr.mxu0 0.0
    %495 = vmatpush1.msra.mxu0 0.0
    %496 = vmatprep.subr.mxu0 0.0
    %497 = vmatpush1.msra.mxu0 0.0
    %498 = vmatprep.subr.mxu0 0.0
    %499 = vmatpush1.msra.mxu0 0.0
    %500 = vmatprep.subr.mxu0 0.0
    %501 = vmatpush1.msra.mxu0 0.0
    %502 = vmatprep.subr.mxu0 0.0
    %503 = vmatpush1.msra.mxu0 0.0
    %504 = vmatprep.subr.mxu0 0.0
    %505 = vmatpush1.msra.mxu0 0.0
    %506 = vmatprep.subr.mxu0 0.0
    %507 = vmatpush1.msra.mxu0 0.0
    %508 = vmatprep.subr.mxu0 0.0
    %509 = vmatpush1.msra.mxu0 0.0
    %510 = vmatprep.subr.mxu0 0.0
    %511 = vmatpush1.msra.mxu0 0.0
    %512 = vmatprep.subr.mxu0 0.0
    %513 = vmatpush1.msra.mxu0 0.0
    %514 = vmatprep.subr.mxu0 0.0
    %515 = vmatpush1.msra.mxu0 0.0
    %516 = vmatprep.mubr.f32.mxu0 0.0
    %517 = vmatmul.mubr.f32.gmra.mrb[0].mxu0 %v450
    %v518 = vpop.f32.mrb[0].mxu0
    %v519 = vadd.f32 0.0, %v518
    %v520 = vpop.f32.mrb[0].mxu0
    %521 = vdwg.mxu0
    %v522 = vadd.f32 %v214, %v519
    %v523 = vmul.f32 %v522, 0.5
    %v524 = vtanh.pop %v523
    %v525 = vadd.f32 %v524, 1.0
    %v526 = vmul.f32 %v525, 0.5
    %v527 = vtanh.pop %v522
    %v528 = vmul.f32 %v526, %v440
    %530 = vrot.lane.b32.xlu0 %v527, 64
    %v531 = vpop.permute.xlu0 %530
    %v533 = vmul.f32 %v526, %v531
    %535 = vrot.lane.b32.xlu0 %v533, 32
    %v536 = vpop.permute.xlu0 %535
    %v538 = vadd.f32 %v528, %v536
    %v539 = vtanh.pop %v538
    %541 = vrot.lane.b32.xlu0 %v539, 64
    %v542 = vpop.permute.xlu0 %541
    %v544 = vmul.f32 %v526, %v542
    %546 = vrot.lane.b32.xlu0 %v544, 32
    %v547 = vpop.permute.xlu0 %546
    %v548 = vsel %vm248, %v547, 0
    %550 = vmatprep.subr.mxu0 0.0
    %551 = vmatpush1.msra.mxu0 %v242
    %552 = vmatprep.subr.mxu0 0.0
    %553 = vmatpush1.msra.mxu0 %v243
    %554 = vmatprep.subr.mxu0 0.0
    %555 = vmatpush1.msra.mxu0 %v244
    %556 = vmatprep.subr.mxu0 0.0
    %557 = vmatpush1.msra.mxu0 %v245
    %558 = vmatprep.subr.mxu0 0.0
    %559 = vmatpush1.msra.mxu0 0.0
    %560 = vmatprep.subr.mxu0 0.0
    %561 = vmatpush1.msra.mxu0 0.0
    %562 = vmatprep.subr.mxu0 0.0
    %563 = vmatpush1.msra.mxu0 0.0
    %564 = vmatprep.subr.mxu0 0.0
    %565 = vmatpush1.msra.mxu0 0.0
    %566 = vmatprep.subr.mxu0 0.0
    %567 = vmatpush1.msra.mxu0 0.0
    %568 = vmatprep.subr.mxu0 0.0
    %569 = vmatpush1.msra.mxu0 0.0
    %570 = vmatprep.subr.mxu0 0.0
    %571 = vmatpush1.msra.mxu0 0.0
    %572 = vmatprep.subr.mxu0 0.0
    %573 = vmatpush1.msra.mxu0 0.0
    %574 = vmatprep.subr.mxu0 0.0
    %575 = vmatpush1.msra.mxu0 0.0
    %576 = vmatprep.subr.mxu0 0.0
    %577 = vmatpush1.msra.mxu0 0.0
    %578 = vmatprep.subr.mxu0 0.0
    %579 = vmatpush1.msra.mxu0 0.0
    %580 = vmatprep.subr.mxu0 0.0
    %581 = vmatpush1.msra.mxu0 0.0
    %582 = vmatprep.subr.mxu0 0.0
    %583 = vmatpush1.msra.mxu0 0.0
    %584 = vmatprep.subr.mxu0 0.0
    %585 = vmatpush1.msra.mxu0 0.0
    %586 = vmatprep.subr.mxu0 0.0
    %587 = vmatpush1.msra.mxu0 0.0
    %588 = vmatprep.subr.mxu0 0.0
    %589 = vmatpush1.msra.mxu0 0.0
    %590 = vmatprep.subr.mxu0 0.0
    %591 = vmatpush1.msra.mxu0 0.0
    %592 = vmatprep.subr.mxu0 0.0
    %593 = vmatpush1.msra.mxu0 0.0
    %594 = vmatprep.subr.mxu0 0.0
    %595 = vmatpush1.msra.mxu0 0.0
    %596 = vmatprep.subr.mxu0 0.0
    %597 = vmatpush1.msra.mxu0 0.0
    %598 = vmatprep.subr.mxu0 0.0
    %599 = vmatpush1.msra.mxu0 0.0
    %600 = vmatprep.subr.mxu0 0.0
    %601 = vmatpush1.msra.mxu0 0.0
    %602 = vmatprep.subr.mxu0 0.0
    %603 = vmatpush1.msra.mxu0 0.0
    %604 = vmatprep.subr.mxu0 0.0
    %605 = vmatpush1.msra.mxu0 0.0
    %606 = vmatprep.subr.mxu0 0.0
    %607 = vmatpush1.msra.mxu0 0.0
    %608 = vmatprep.subr.mxu0 0.0
    %609 = vmatpush1.msra.mxu0 0.0
    %610 = vmatprep.subr.mxu0 0.0
    %611 = vmatpush1.msra.mxu0 0.0
    %612 = vmatprep.subr.mxu0 0.0
    %613 = vmatpush1.msra.mxu0 0.0
    %614 = vmatprep.mubr.f32.mxu0 0.0
    %615 = vmatmul.mubr.f32.gmra.mrb[0].mxu0 %v548
    %v616 = vpop.f32.mrb[0].mxu0
    %v617 = vadd.f32 0.0, %v616
    %v618 = vpop.f32.mrb[0].mxu0
    %619 = vdwg.mxu0
    %v620 = vadd.f32 %v219, %v617
    %v621 = vmul.f32 %v620, 0.5
    %v622 = vtanh.pop %v621
    %v623 = vadd.f32 %v622, 1.0
    %v624 = vmul.f32 %v623, 0.5
    %v625 = vtanh.pop %v620
    %v626 = vmul.f32 %v624, %v538
    %628 = vrot.lane.b32.xlu0 %v625, 64
    %v629 = vpop.permute.xlu0 %628
    %v631 = vmul.f32 %v624, %v629
    %633 = vrot.lane.b32.xlu0 %v631, 32
    %v634 = vpop.permute.xlu0 %633
    %v636 = vadd.f32 %v626, %v634
    %v637 = vtanh.pop %v636
    %639 = vrot.lane.b32.xlu0 %v637, 64
    %v640 = vpop.permute.xlu0 %639
    %v642 = vmul.f32 %v624, %v640
    %644 = vrot.lane.b32.xlu0 %v642, 32
    %v645 = vpop.permute.xlu0 %644
    %v646 = vsel %vm248, %v645, 0
    %648 = vmatprep.subr.mxu0 0.0
    %649 = vmatpush1.msra.mxu0 %v242
    %650 = vmatprep.subr.mxu0 0.0
    %651 = vmatpush1.msra.mxu0 %v243
    %652 = vmatprep.subr.mxu0 0.0
    %653 = vmatpush1.msra.mxu0 %v244
    %654 = vmatprep.subr.mxu0 0.0
    %655 = vmatpush1.msra.mxu0 %v245
    %656 = vmatprep.subr.mxu0 0.0
    %657 = vmatpush1.msra.mxu0 0.0
    %658 = vmatprep.subr.mxu0 0.0
    %659 = vmatpush1.msra.mxu0 0.0
    %660 = vmatprep.subr.mxu0 0.0
    %661 = vmatpush1.msra.mxu0 0.0
    %662 = vmatprep.subr.mxu0 0.0
    %663 = vmatpush1.msra.mxu0 0.0
    %664 = vmatprep.subr.mxu0 0.0
    %665 = vmatpush1.msra.mxu0 0.0
    %666 = vmatprep.subr.mxu0 0.0
    %667 = vmatpush1.msra.mxu0 0.0
    %668 = vmatprep.subr.mxu0 0.0
    %669 = vmatpush1.msra.mxu0 0.0
    %670 = vmatprep.subr.mxu0 0.0
    %671 = vmatpush1.msra.mxu0 0.0
    %672 = vmatprep.subr.mxu0 0.0
    %673 = vmatpush1.msra.mxu0 0.0
    %674 = vmatprep.subr.mxu0 0.0
    %675 = vmatpush1.msra.mxu0 0.0
    %676 = vmatprep.subr.mxu0 0.0
    %677 = vmatpush1.msra.mxu0 0.0
    %678 = vmatprep.subr.mxu0 0.0
    %679 = vmatpush1.msra.mxu0 0.0
    %680 = vmatprep.subr.mxu0 0.0
    %681 = vmatpush1.msra.mxu0 0.0
    %682 = vmatprep.subr.mxu0 0.0
    %683 = vmatpush1.msra.mxu0 0.0
    %684 = vmatprep.subr.mxu0 0.0
    %685 = vmatpush1.msra.mxu0 0.0
    %686 = vmatprep.subr.mxu0 0.0
    %687 = vmatpush1.msra.mxu0 0.0
    %688 = vmatprep.subr.mxu0 0.0
    %689 = vmatpush1.msra.mxu0 0.0
    %690 = vmatprep.subr.mxu0 0.0
    %691 = vmatpush1.msra.mxu0 0.0
    %692 = vmatprep.subr.mxu0 0.0
    %693 = vmatpush1.msra.mxu0 0.0
    %694 = vmatprep.subr.mxu0 0.0
    %695 = vmatpush1.msra.mxu0 0.0
    %696 = vmatprep.subr.mxu0 0.0
    %697 = vmatpush1.msra.mxu0 0.0
    %698 = vmatprep.subr.mxu0 0.0
    %699 = vmatpush1.msra.mxu0 0.0
    %700 = vmatprep.subr.mxu0 0.0
    %701 = vmatpush1.msra.mxu0 0.0
    %702 = vmatprep.subr.mxu0 0.0
    %703 = vmatpush1.msra.mxu0 0.0
    %704 = vmatprep.subr.mxu0 0.0
    %705 = vmatpush1.msra.mxu0 0.0
    %706 = vmatprep.subr.mxu0 0.0
    %707 = vmatpush1.msra.mxu0 0.0
    %708 = vmatprep.subr.mxu0 0.0
    %709 = vmatpush1.msra.mxu0 0.0
    %710 = vmatprep.subr.mxu0 0.0
    %711 = vmatpush1.msra.mxu0 0.0
    %712 = vmatprep.mubr.f32.mxu0 0.0
    %713 = vmatmul.mubr.f32.gmra.mrb[0].mxu0 %v646
    %v714 = vpop.f32.mrb[0].mxu0
    %v715 = vadd.f32 0.0, %v714
    %v716 = vpop.f32.mrb[0].mxu0
    %717 = vdwg.mxu0
    %v718 = vadd.f32 %v224, %v715
    %v719 = vmul.f32 %v718, 0.5
    %v720 = vtanh.pop %v719
    %v721 = vadd.f32 %v720, 1.0
    %v722 = vmul.f32 %v721, 0.5
    %v723 = vtanh.pop %v718
    %v724 = vmul.f32 %v722, %v636
    %726 = vrot.lane.b32.xlu0 %v723, 64
    %v727 = vpop.permute.xlu0 %726
    %v729 = vmul.f32 %v722, %v727
    %731 = vrot.lane.b32.xlu0 %v729, 32
    %v732 = vpop.permute.xlu0 %731
    %v734 = vadd.f32 %v724, %v732
    %v735 = vtanh.pop %v734
    %737 = vrot.lane.b32.xlu0 %v735, 64
    %v738 = vpop.permute.xlu0 %737
    %v740 = vmul.f32 %v722, %v738
    %742 = vrot.lane.b32.xlu0 %v740, 32
    %v743 = vpop.permute.xlu0 %742
    %v744 = vsel %vm248, %v743, 0
    %746 = vmatprep.subr.mxu0 0.0
    %747 = vmatpush1.msra.mxu0 %v242
    %748 = vmatprep.subr.mxu0 0.0
    %749 = vmatpush1.msra.mxu0 %v243
    %750 = vmatprep.subr.mxu0 0.0
    %751 = vmatpush1.msra.mxu0 %v244
    %752 = vmatprep.subr.mxu0 0.0
    %753 = vmatpush1.msra.mxu0 %v245
    %754 = vmatprep.subr.mxu0 0.0
    %755 = vmatpush1.msra.mxu0 0.0
    %756 = vmatprep.subr.mxu0 0.0
    %757 = vmatpush1.msra.mxu0 0.0
    %758 = vmatprep.subr.mxu0 0.0
    %759 = vmatpush1.msra.mxu0 0.0
    %760 = vmatprep.subr.mxu0 0.0
    %761 = vmatpush1.msra.mxu0 0.0
    %762 = vmatprep.subr.mxu0 0.0
    %763 = vmatpush1.msra.mxu0 0.0
    %764 = vmatprep.subr.mxu0 0.0
    %765 = vmatpush1.msra.mxu0 0.0
    %766 = vmatprep.subr.mxu0 0.0
    %767 = vmatpush1.msra.mxu0 0.0
    %768 = vmatprep.subr.mxu0 0.0
    %769 = vmatpush1.msra.mxu0 0.0
    %770 = vmatprep.subr.mxu0 0.0
    %771 = vmatpush1.msra.mxu0 0.0
    %772 = vmatprep.subr.mxu0 0.0
    %773 = vmatpush1.msra.mxu0 0.0
    %774 = vmatprep.subr.mxu0 0.0
    %775 = vmatpush1.msra.mxu0 0.0
    %776 = vmatprep.subr.mxu0 0.0
    %777 = vmatpush1.msra.mxu0 0.0
    %778 = vmatprep.subr.mxu0 0.0
    %779 = vmatpush1.msra.mxu0 0.0
    %780 = vmatprep.subr.mxu0 0.0
    %781 = vmatpush1.msra.mxu0 0.0
    %782 = vmatprep.subr.mxu0 0.0
    %783 = vmatpush1.msra.mxu0 0.0
    %784 = vmatprep.subr.mxu0 0.0
    %785 = vmatpush1.msra.mxu0 0.0
    %786 = vmatprep.subr.mxu0 0.0
    %787 = vmatpush1.msra.mxu0 0.0
    %788 = vmatprep.subr.mxu0 0.0
    %789 = vmatpush1.msra.mxu0 0.0
    %790 = vmatprep.subr.mxu0 0.0
    %791 = vmatpush1.msra.mxu0 0.0
    %792 = vmatprep.subr.mxu0 0.0
    %793 = vmatpush1.msra.mxu0 0.0
    %794 = vmatprep.subr.mxu0 0.0
    %795 = vmatpush1.msra.mxu0 0.0
    %796 = vmatprep.subr.mxu0 0.0
    %797 = vmatpush1.msra.mxu0 0.0
    %798 = vmatprep.subr.mxu0 0.0
    %799 = vmatpush1.msra.mxu0 0.0
    %800 = vmatprep.subr.mxu0 0.0
    %801 = vmatpush1.msra.mxu0 0.0
    %802 = vmatprep.subr.mxu0 0.0
    %803 = vmatpush1.msra.mxu0 0.0
    %804 = vmatprep.subr.mxu0 0.0
    %805 = vmatpush1.msra.mxu0 0.0
    %806 = vmatprep.subr.mxu0 0.0
    %807 = vmatpush1.msra.mxu0 0.0
    %808 = vmatprep.subr.mxu0 0.0
    %809 = vmatpush1.msra.mxu0 0.0
    %810 = vmatprep.mubr.f32.mxu0 0.0
    %811 = vmatmul.mubr.f32.gmra.mrb[0].mxu0 %v744
    %v812 = vpop.f32.mrb[0].mxu0
    %v813 = vadd.f32 0.0, %v812
    %v814 = vpop.f32.mrb[0].mxu0
    %815 = vdwg.mxu0
    %v816 = vadd.f32 %v229, %v813
    %v817 = vmul.f32 %v816, 0.5
    %v818 = vtanh.pop %v817
    %v819 = vadd.f32 %v818, 1.0
    %v820 = vmul.f32 %v819, 0.5
    %v821 = vtanh.pop %v816
    %v822 = vmul.f32 %v820, %v734
    %824 = vrot.lane.b32.xlu0 %v821, 64
    %v825 = vpop.permute.xlu0 %824
    %v827 = vmul.f32 %v820, %v825
    %829 = vrot.lane.b32.xlu0 %v827, 32
    %v830 = vpop.permute.xlu0 %829
    %v832 = vadd.f32 %v822, %v830
    %v833 = vtanh.pop %v832
    %835 = vrot.lane.b32.xlu0 %v833, 64
    %v836 = vpop.permute.xlu0 %835
    %v838 = vmul.f32 %v820, %v836
    %840 = vrot.lane.b32.xlu0 %v838, 32
    %v841 = vpop.permute.xlu0 %840
    %v842 = vsel %vm248, %v841, 0
    %844 = vmatprep.subr.mxu0 0.0
    %845 = vmatpush1.msra.mxu0 %v242
    %846 = vmatprep.subr.mxu0 0.0
    %847 = vmatpush1.msra.mxu0 %v243
    %848 = vmatprep.subr.mxu0 0.0
    %849 = vmatpush1.msra.mxu0 %v244
    %850 = vmatprep.subr.mxu0 0.0
    %851 = vmatpush1.msra.mxu0 %v245
    %852 = vmatprep.subr.mxu0 0.0
    %853 = vmatpush1.msra.mxu0 0.0
    %854 = vmatprep.subr.mxu0 0.0
    %855 = vmatpush1.msra.mxu0 0.0
    %856 = vmatprep.subr.mxu0 0.0
    %857 = vmatpush1.msra.mxu0 0.0
    %858 = vmatprep.subr.mxu0 0.0
    %859 = vmatpush1.msra.mxu0 0.0
    %860 = vmatprep.subr.mxu0 0.0
    %861 = vmatpush1.msra.mxu0 0.0
    %862 = vmatprep.subr.mxu0 0.0
    %863 = vmatpush1.msra.mxu0 0.0
    %864 = vmatprep.subr.mxu0 0.0
    %865 = vmatpush1.msra.mxu0 0.0
    %866 = vmatprep.subr.mxu0 0.0
    %867 = vmatpush1.msra.mxu0 0.0
    %868 = vmatprep.subr.mxu0 0.0
    %869 = vmatpush1.msra.mxu0 0.0
    %870 = vmatprep.subr.mxu0 0.0
    %871 = vmatpush1.msra.mxu0 0.0
    %872 = vmatprep.subr.mxu0 0.0
    %873 = vmatpush1.msra.mxu0 0.0
    %874 = vmatprep.subr.mxu0 0.0
    %875 = vmatpush1.msra.mxu0 0.0
    %876 = vmatprep.subr.mxu0 0.0
    %877 = vmatpush1.msra.mxu0 0.0
    %878 = vmatprep.subr.mxu0 0.0
    %879 = vmatpush1.msra.mxu0 0.0
    %880 = vmatprep.subr.mxu0 0.0
    %881 = vmatpush1.msra.mxu0 0.0
    %882 = vmatprep.subr.mxu0 0.0
    %883 = vmatpush1.msra.mxu0 0.0
    %884 = vmatprep.subr.mxu0 0.0
    %885 = vmatpush1.msra.mxu0 0.0
    %886 = vmatprep.subr.mxu0 0.0
    %887 = vmatpush1.msra.mxu0 0.0
    %888 = vmatprep.subr.mxu0 0.0
    %889 = vmatpush1.msra.mxu0 0.0
    %890 = vmatprep.subr.mxu0 0.0
    %891 = vmatpush1.msra.mxu0 0.0
    %892 = vmatprep.subr.mxu0 0.0
    %893 = vmatpush1.msra.mxu0 0.0
    %894 = vmatprep.subr.mxu0 0.0
    %895 = vmatpush1.msra.mxu0 0.0
    %896 = vmatprep.subr.mxu0 0.0
    %897 = vmatpush1.msra.mxu0 0.0
    %898 = vmatprep.subr.mxu0 0.0
    %899 = vmatpush1.msra.mxu0 0.0
    %900 = vmatprep.subr.mxu0 0.0
    %901 = vmatpush1.msra.mxu0 0.0
    %902 = vmatprep.subr.mxu0 0.0
    %903 = vmatpush1.msra.mxu0 0.0
    %904 = vmatprep.subr.mxu0 0.0
    %905 = vmatpush1.msra.mxu0 0.0
    %906 = vmatprep.subr.mxu0 0.0
    %907 = vmatpush1.msra.mxu0 0.0
    %908 = vmatprep.mubr.f32.mxu0 0.0
    %909 = vmatmul.mubr.f32.gmra.mrb[0].mxu0 %v842
    %v910 = vpop.f32.mrb[0].mxu0
    %v911 = vadd.f32 0.0, %v910
    %v912 = vpop.f32.mrb[0].mxu0
    %913 = vdwg.mxu0
    %v914 = vadd.f32 %v234, %v911
    %v915 = vmul.f32 %v914, 0.5
    %v916 = vtanh.pop %v915
    %v917 = vadd.f32 %v916, 1.0
    %v918 = vmul.f32 %v917, 0.5
    %v919 = vtanh.pop %v914
    %v920 = vmul.f32 %v918, %v832
    %922 = vrot.lane.b32.xlu0 %v919, 64
    %v923 = vpop.permute.xlu0 %922
    %v925 = vmul.f32 %v918, %v923
    %927 = vrot.lane.b32.xlu0 %v925, 32
    %v928 = vpop.permute.xlu0 %927
    %v930 = vadd.f32 %v920, %v928
    %v931 = vtanh.pop %v930
    %933 = vrot.lane.b32.xlu0 %v931, 64
    %v934 = vpop.permute.xlu0 %933
    %v936 = vmul.f32 %v918, %v934
    %938 = vrot.lane.b32.xlu0 %v936, 32
    %v939 = vpop.permute.xlu0 %938
    %v940 = vsel %vm248, %v939, 0
    %942 = vmatprep.subr.mxu0 0.0
    %943 = vmatpush1.msra.mxu0 %v242
    %944 = vmatprep.subr.mxu0 0.0
    %945 = vmatpush1.msra.mxu0 %v243
    %946 = vmatprep.subr.mxu0 0.0
    %947 = vmatpush1.msra.mxu0 %v244
    %948 = vmatprep.subr.mxu0 0.0
    %949 = vmatpush1.msra.mxu0 %v245
    %950 = vmatprep.subr.mxu0 0.0
    %951 = vmatpush1.msra.mxu0 0.0
    %952 = vmatprep.subr.mxu0 0.0
    %953 = vmatpush1.msra.mxu0 0.0
    %954 = vmatprep.subr.mxu0 0.0
    %955 = vmatpush1.msra.mxu0 0.0
    %956 = vmatprep.subr.mxu0 0.0
    %957 = vmatpush1.msra.mxu0 0.0
    %958 = vmatprep.subr.mxu0 0.0
    %959 = vmatpush1.msra.mxu0 0.0
    %960 = vmatprep.subr.mxu0 0.0
    %961 = vmatpush1.msra.mxu0 0.0
    %962 = vmatprep.subr.mxu0 0.0
    %963 = vmatpush1.msra.mxu0 0.0
    %964 = vmatprep.subr.mxu0 0.0
    %965 = vmatpush1.msra.mxu0 0.0
    %966 = vmatprep.subr.mxu0 0.0
    %967 = vmatpush1.msra.mxu0 0.0
    %968 = vmatprep.subr.mxu0 0.0
    %969 = vmatpush1.msra.mxu0 0.0
    %970 = vmatprep.subr.mxu0 0.0
    %971 = vmatpush1.msra.mxu0 0.0
    %972 = vmatprep.subr.mxu0 0.0
    %973 = vmatpush1.msra.mxu0 0.0
    %974 = vmatprep.subr.mxu0 0.0
    %975 = vmatpush1.msra.mxu0 0.0
    %976 = vmatprep.subr.mxu0 0.0
    %977 = vmatpush1.msra.mxu0 0.0
    %978 = vmatprep.subr.mxu0 0.0
    %979 = vmatpush1.msra.mxu0 0.0
    %980 = vmatprep.subr.mxu0 0.0
    %981 = vmatpush1.msra.mxu0 0.0
    %982 = vmatprep.subr.mxu0 0.0
    %983 = vmatpush1.msra.mxu0 0.0
    %984 = vmatprep.subr.mxu0 0.0
    %985 = vmatpush1.msra.mxu0 0.0
    %986 = vmatprep.subr.mxu0 0.0
    %987 = vmatpush1.msra.mxu0 0.0
    %988 = vmatprep.subr.mxu0 0.0
    %989 = vmatpush1.msra.mxu0 0.0
    %990 = vmatprep.subr.mxu0 0.0
    %991 = vmatpush1.msra.mxu0 0.0
    %992 = vmatprep.subr.mxu0 0.0
    %993 = vmatpush1.msra.mxu0 0.0
    %994 = vmatprep.subr.mxu0 0.0
    %995 = vmatpush1.msra.mxu0 0.0
    %996 = vmatprep.subr.mxu0 0.0
    %997 = vmatpush1.msra.mxu0 0.0
    %998 = vmatprep.subr.mxu0 0.0
    %999 = vmatpush1.msra.mxu0 0.0
    %1000 = vmatprep.subr.mxu0 0.0
    %1001 = vmatpush1.msra.mxu0 0.0
    %1002 = vmatprep.subr.mxu0 0.0
    %1003 = vmatpush1.msra.mxu0 0.0
    %1004 = vmatprep.subr.mxu0 0.0
    %1005 = vmatpush1.msra.mxu0 0.0
    %1006 = vmatprep.mubr.f32.mxu0 0.0
    %1007 = vmatmul.mubr.f32.gmra.mrb[0].mxu0 %v940
    %v1008 = vpop.f32.mrb[0].mxu0
    %v1009 = vadd.f32 0.0, %v1008
    %v1010 = vpop.f32.mrb[0].mxu0
    %1011 = vdwg.mxu0
    %v1012 = vadd.f32 %v239, %v1009
    %v1013 = vmul.f32 %v1012, 0.5
    %v1014 = vtanh.pop %v1013
    %v1015 = vadd.f32 %v1014, 1.0
    %v1016 = vmul.f32 %v1015, 0.5
    %v1017 = vtanh.pop %v1012
    %v1018 = vmul.f32 %v1016, %v930
    %1020 = vrot.lane.b32.xlu0 %v1017, 64
    %v1021 = vpop.permute.xlu0 %1020
    %v1023 = vmul.f32 %v1016, %v1021
    %1025 = vrot.lane.b32.xlu0 %v1023, 32
    %v1026 = vpop.permute.xlu0 %1025
    %v1028 = vadd.f32 %v1018, %v1026
    %v1029 = vtanh.pop %v1028
    %1031 = vrot.lane.b32.xlu0 %v1029, 64
    %v1032 = vpop.permute.xlu0 %1031
    %v1034 = vmul.f32 %v1016, %v1032
    %1036 = vrot.lane.b32.xlu0 %v1034, 32
    %v1037 = vpop.permute.xlu0 %1036
    %1039 = vst.msk [vmem:[#allocation11] sm:$0xff] %vm248, %v1037
    %1041 = vrot.lane.b32.xlu0 %v1028, 96
    %v1042 = vpop.permute.xlu0 %1041
    %1044 = vst.msk [vmem:[#allocation13] sm:$0xff] %vm248, %v1042
    %v1045 = vld [vmem:[#allocation8] sm:$0xff]
    %v1046 = vld [vmem:[#allocation8 + $0x8] sm:$0xff]
    %v1047 = vld [vmem:[#allocation8 + $0x10] sm:$0xff]
    %v1048 = vld [vmem:[#allocation8 + $0x18] sm:$0xff]
    %v1049 = vld [vmem:[%s7] sm:$0x1]
    %v1051 = vlaneseq
    %v1052 = vshrl.u32 %v1051, 7
    %v1053 = vsub.s32 0, %v1052
    %v1054 = vrot.slane %v1049, %v1053
    %v1056 = vsel %vm248, %v1037, 0
    %1058 = vmatprep.subr.mxu0 0.0
    %1059 = vmatpush1.msra.mxu0 %v1045
    %1060 = vmatprep.subr.mxu0 0.0
    %1061 = vmatpush1.msra.mxu0 %v1046
    %1062 = vmatprep.subr.mxu0 0.0
    %1063 = vmatpush1.msra.mxu0 %v1047
    %1064 = vmatprep.subr.mxu0 0.0
    %1065 = vmatpush1.msra.mxu0 %v1048
    %1066 = vmatprep.subr.mxu0 0.0
    %1067 = vmatpush1.msra.mxu0 0.0
    %1068 = vmatprep.subr.mxu0 0.0
    %1069 = vmatpush1.msra.mxu0 0.0
    %1070 = vmatprep.subr.mxu0 0.0
    %1071 = vmatpush1.msra.mxu0 0.0
    %1072 = vmatprep.subr.mxu0 0.0
    %1073 = vmatpush1.msra.mxu0 0.0
    %1074 = vmatprep.subr.mxu0 0.0
    %1075 = vmatpush1.msra.mxu0 0.0
    %1076 = vmatprep.subr.mxu0 0.0
    %1077 = vmatpush1.msra.mxu0 0.0
    %1078 = vmatprep.subr.mxu0 0.0
    %1079 = vmatpush1.msra.mxu0 0.0
    %1080 = vmatprep.subr.mxu0 0.0
    %1081 = vmatpush1.msra.mxu0 0.0
    %1082 = vmatprep.subr.mxu0 0.0
    %1083 = vmatpush1.msra.mxu0 0.0
    %1084 = vmatprep.subr.mxu0 0.0
    %1085 = vmatpush1.msra.mxu0 0.0
    %1086 = vmatprep.subr.mxu0 0.0
    %1087 = vmatpush1.msra.mxu0 0.0
    %1088 = vmatprep.subr.mxu0 0.0
    %1089 = vmatpush1.msra.mxu0 0.0
    %1090 = vmatprep.subr.mxu0 0.0
    %1091 = vmatpush1.msra.mxu0 0.0
    %1092 = vmatprep.subr.mxu0 0.0
    %1093 = vmatpush1.msra.mxu0 0.0
    %1094 = vmatprep.subr.mxu0 0.0
    %1095 = vmatpush1.msra.mxu0 0.0
    %1096 = vmatprep.subr.mxu0 0.0
    %1097 = vmatpush1.msra.mxu0 0.0
    %1098 = vmatprep.subr.mxu0 0.0
    %1099 = vmatpush1.msra.mxu0 0.0
    %1100 = vmatprep.subr.mxu0 0.0
    %1101 = vmatpush1.msra.mxu0 0.0
    %1102 = vmatprep.subr.mxu0 0.0
    %1103 = vmatpush1.msra.mxu0 0.0
    %1104 = vmatprep.subr.mxu0 0.0
    %1105 = vmatpush1.msra.mxu0 0.0
    %1106 = vmatprep.subr.mxu0 0.0
    %1107 = vmatpush1.msra.mxu0 0.0
    %1108 = vmatprep.subr.mxu0 0.0
    %1109 = vmatpush1.msra.mxu0 0.0
    %1110 = vmatprep.subr.mxu0 0.0
    %1111 = vmatpush1.msra.mxu0 0.0
    %1112 = vmatprep.subr.mxu0 0.0
    %1113 = vmatpush1.msra.mxu0 0.0
    %1114 = vmatprep.subr.mxu0 0.0
    %1115 = vmatpush1.msra.mxu0 0.0
    %1116 = vmatprep.subr.mxu0 0.0
    %1117 = vmatpush1.msra.mxu0 0.0
    %1118 = vmatprep.subr.mxu0 0.0
    %1119 = vmatpush1.msra.mxu0 0.0
    %1120 = vmatprep.subr.mxu0 0.0
    %1121 = vmatpush1.msra.mxu0 0.0
    %1122 = vmatprep.mubr.f32.mxu0 0.0
    %1123 = vmatmul.mubr.f32.gmra.mrb[0].mxu0 %v1056
    %v1124 = vpop.f32.mrb[0].mxu0
    %v1125 = vadd.f32 %v1054, %v1124
    %v1126 = vpop.f32.mrb[0].mxu0
    %1127 = vdwg.mxu0
    %1128 = vmax.xlane.f32.xlu0 %v1125
    %v1129 = vpop.xlane.xlu0 %1128
    %v1130 = vsub.f32 %v1125, %v1129
    %v1131 = vmul.f32 %v1130, 1.442695
    %v1132 = vpow.pop %v1131
    %1133 = vadd.xlane.f32.xlu0 %v1132
    %v1134 = vpop.xlane.xlu0 %1133
    %v1135 = vlog2.pop %v1134
    %v1136 = vmul.f32 %v1135, 0.6931472
    %v1137 = vsub.f32 %v1130, %v1136
    %1138 = vst [vmem:[#allocation10] sm:$0xff] %v1137
    // Predicated region
    $region50: #{tpu_custom_call.1} parent=1 // pred_check
      _
    $region51: #{tpu_custom_call.1} parent=1 // pred_check_branch
      %1140 = sbr.rel (0) target = $region53
    $region52: #{tpu_custom_call.1} parent=1 // pred_region
      %s1142 = ssub.s32 128, 128
      %1143 = vsyncadd [#allocation4], %s1142
      %s1145 = sshll.u32 [#allocation10], 4
      %s1146 = int_to_ptr.vmem [resolvable:$true] %s1145
      %1148 = dma.vmem_to_hbm [thread:$0]  %s1146, 128, %s8, [#allocation4]
    $region53: #{tpu_custom_call.1} parent=1 // pred_fallthru
      _
    // Predicated region
    $region54: #{tpu_custom_call.1} parent=1 // pred_check
      _
    $region55: #{tpu_custom_call.1} parent=1 // pred_check_branch
      %1150 = sbr.rel (0) target = $region57
    $region56: #{tpu_custom_call.1} parent=1 // pred_region
      %s1152 = ssub.s32 128, 128
      %1153 = vsyncadd [#allocation12], %s1152
      %s1155 = sshll.u32 [#allocation11], 4
      %s1156 = int_to_ptr.vmem [resolvable:$true] %s1155
      %1158 = dma.vmem_to_hbm [thread:$0]  %s1156, 128, %s9, [#allocation12]
    $region57: #{tpu_custom_call.1} parent=1 // pred_fallthru
      _
    // Predicated region
    $region58: #{tpu_custom_call.1} parent=1 // pred_check
      _
    $region59: #{tpu_custom_call.1} parent=1 // pred_check_branch
      %1160 = sbr.rel (0) target = $region61
    $region60: #{tpu_custom_call.1} parent=1 // pred_region
      %s1162 = ssub.s32 128, 128
      %1163 = vsyncadd [#allocation12], %s1162
      %s1165 = sshll.u32 [#allocation13], 4
      %s1166 = int_to_ptr.vmem [resolvable:$true] %s1165
      %1168 = dma.vmem_to_hbm [thread:$0]  %s1166, 128, %s10, [#allocation12]
    $region61: #{tpu_custom_call.1} parent=1 // pred_fallthru
      _
    // Predicated region
    $region62: #{tpu_custom_call.1} parent=1 // pred_check
      _
    $region63: #{tpu_custom_call.1} parent=1 // pred_check_branch
      %1170 = sbr.rel (0) target = $region65
    $region64: #{tpu_custom_call.1} parent=1 // pred_region
      %1171 = dma.done [#allocation4], 128
    $region65: #{tpu_custom_call.1} parent=1 // pred_fallthru
      _
    // Predicated region
    $region66: #{tpu_custom_call.1} parent=1 // pred_check
      _
    $region67: #{tpu_custom_call.1} parent=1 // pred_check_branch
      %1173 = sbr.rel (0) target = $region69
    $region68: #{tpu_custom_call.1} parent=1 // pred_region
      %1174 = dma.done [#allocation12], 128
    $region69: #{tpu_custom_call.1} parent=1 // pred_fallthru
      _
    // Predicated region
    $region70: #{tpu_custom_call.1} parent=1 // pred_check
      _
    $region71: #{tpu_custom_call.1} parent=1 // pred_check_branch
      %1176 = sbr.rel (0) target = $region73
    $region72: #{tpu_custom_call.1} parent=1 // pred_region
      %1177 = dma.done [#allocation12], 128
    $region73: #{tpu_custom_call.1} parent=1 // pred_fallthru
      _
    %1178 = vsyncpa [#allocation3], 1
    %1179 = vsyncpa [#allocation6], 1
    %1180 = vsyncpa [#allocation9], 1
    %1181 = vsyncpa [#allocation4], 1
    %1182 = vsyncpa [#allocation12], 1

</llo_original>
